<compile_context>
chip_gen: v5e
topology: v5e:2x2
jax: 0.10.0
libtpu: 0.0.40
codegen_flags: <defaults>
</compile_context>

<pallas_src>
import math
from functools import partial

import jax
import jax.numpy as jnp
from jax.experimental import pallas as pl
from jax.experimental.pallas import tpu as pltpu


def _double_conv_kernel(x_ref, m_ref, w1_ref, g1_ref, b1_ref,
                        w2_ref, g2_ref, b2_ref, o_ref, p1_sc, p2_sc,
                        *, H, W, residual):
    # x_ref : (Cin, H*W)     one sample, channel-major, lane-dense
    # m_ref : (9, H*W)       per-tap border-validity masks (1.0 / 0.0)
    # w*_ref: (Cout, 9*Cin)  im2col weights (tap-major, then input channel)
    # g*/b* : (C, 1)         GroupNorm(1) affine params
    # o_ref : (Cout, H*W)    flattened-NCHW output tile
    # p*_sc : (9*C, H*W)     VMEM im2col patch buffers
    HW = H * W
    eps = 1e-5
    inv_sqrt2 = 1.0 / math.sqrt(2.0)

    def conv3x3(a, w_ref, p_sc):
        # a: (C, HW) f32.  Build the (9*C, HW) im2col buffer with lane rolls
        # (XLU) + multiplicative border masks, then a single MXU matmul.
        C = a.shape[0]
        for t in range(9):
            dyo, dxo = t // 3 - 1, t % 3 - 1
            off = dyo * W + dxo                       # flat source offset
            if off == 0:
                tap = a                               # center tap: no shift/mask
            else:
                shifted = pltpu.roll(a, shift=(-off) % HW, axis=1)
                tap = shifted * m_ref[t:t + 1, :]     # zero out-of-bounds taps
            p_sc[t * C:(t + 1) * C, :] = tap
        return jnp.dot(w_ref[...], p_sc[...].astype(w_ref.dtype),
                       preferred_element_type=jnp.float32)   # (Cout, HW) f32

    def groupnorm(a, g_ref, b_ref):
        # GroupNorm(num_groups=1): stats over all of (C, H*W), single pass.
        inv_n = 1.0 / (a.shape[0] * a.shape[1])
        mean = jnp.sum(a) * inv_n
        var = jnp.sum(a * a) * inv_n - mean * mean
        return (a - mean) * jax.lax.rsqrt(var + eps) * g_ref[...] + b_ref[...]

    x = x_ref[...].astype(jnp.float32)                 # (Cin, HW)

    h = conv3x3(x, w1_ref, p1_sc)                      # conv1 (no bias)
    h = groupnorm(h, g1_ref, b1_ref)                   # GroupNorm(1, C1)
    h = 0.5 * h * (1.0 + jax.lax.erf(h * inv_sqrt2))   # exact-erf GELU (torch default)

    out = conv3x3(h, w2_ref, p2_sc)                    # conv2 (no bias)
    out = groupnorm(out, g2_ref, b2_ref)               # GroupNorm(1, C2)

    if residual:
        out = out + x                                  # requires Cin == Cout

    o_ref[...] = out.astype(o_ref.dtype)               # lane-dense (C2, 256) store


def double_conv(x_nchw, w1_oihw, g1, b1, w2_oihw, g2, b2, *,
                residual=False, matmul_dtype=jnp.float32):
    """DoubleConv forward.

    x_nchw : (N, Cin, H, W) float32
    w*_oihw: PyTorch Conv2d weights (out_ch, in_ch, 3, 3), bias-free
    g*/b*  : GroupNorm(1, C) affine params, shape (C,)
    matmul_dtype: jnp.float32 (exact) or jnp.bfloat16 (faster MXU on v6e/v7x,
                  f32 accumulation preserved).
    """
    N, Cin, H, W = x_nchw.shape
    HW = H * W
    C1 = w1_oihw.shape[0]                 # conv1 out channels (== GN1 channels)
    C2 = w2_oihw.shape[0]                 # conv2 out channels
    if w2_oihw.shape[1] != C1:
        raise ValueError("conv2 in_ch must equal conv1 out_ch")
    if residual and Cin != C2:
        raise ValueError("residual path requires in_ch == out_ch")

    # Flattened-NCHW: (C, H*W) per sample with H*W on the lane axis.  Both
    # reshapes here are metadata-only (no HBM pass, unlike transpose + pad).
    x_flat = x_nchw.reshape(N, Cin, HW)

    # Per-tap border masks (valid=1.0, out-of-bounds=0.0), built once on host.
    yy, xx = jnp.meshgrid(jnp.arange(H), jnp.arange(W), indexing="ij")
    yy = yy.reshape(-1)
    xx = xx.reshape(-1)
    mask_rows = []
    for t in range(9):
        dyo, dxo = t // 3 - 1, t % 3 - 1
        ok = ((yy + dyo >= 0) & (yy + dyo < H) &
              (xx + dxo >= 0) & (xx + dxo < W))
        mask_rows.append(ok)
    masks = jnp.stack(mask_rows).astype(jnp.float32)          # (9, HW)

    # (O, I, kh, kw) -> (O, kh, kw, I) -> (O, 9*I): column k = tap*I + c matches
    # the im2col buffer row ordering built inside the kernel.
    w1 = jnp.transpose(w1_oihw, (0, 2, 3, 1)).reshape(C1, 9 * Cin).astype(matmul_dtype)
    w2 = jnp.transpose(w2_oihw, (0, 2, 3, 1)).reshape(C2, 9 * C1).astype(matmul_dtype)
    g1_ = g1.reshape(C1, 1).astype(jnp.float32)
    b1_ = b1.reshape(C1, 1).astype(jnp.float32)
    g2_ = g2.reshape(C2, 1).astype(jnp.float32)
    b2_ = b2.reshape(C2, 1).astype(jnp.float32)

    kernel = partial(_double_conv_kernel, H=H, W=W, residual=residual)

    # NOTE: for production UNet sizes (e.g. 256x256x64) add H-strip tiling with
    # a 1-row halo + two-pass GroupNorm stats so a tile fits v7x's 64 MiB VMEM,
    # and a second parallel grid axis to feed both v7x TensorCores.
    out_flat = pl.pallas_call(
        kernel,
        out_shape=jax.ShapeDtypeStruct((N, C2, HW), jnp.float32),
        grid_spec=pltpu.PrefetchScalarGridSpec(
            num_scalar_prefetch=0,
            grid=(N,),
            in_specs=[
                pl.BlockSpec((pl.Squeezed(), Cin, HW), lambda n: (n, 0, 0)),
                pl.BlockSpec((9, HW), lambda n: (0, 0)),
                pl.BlockSpec((C1, 9 * Cin), lambda n: (0, 0)),
                pl.BlockSpec((C1, 1), lambda n: (0, 0)),
                pl.BlockSpec((C1, 1), lambda n: (0, 0)),
                pl.BlockSpec((C2, 9 * C1), lambda n: (0, 0)),
                pl.BlockSpec((C2, 1), lambda n: (0, 0)),
                pl.BlockSpec((C2, 1), lambda n: (0, 0)),
            ],
            out_specs=pl.BlockSpec((pl.Squeezed(), C2, HW), lambda n: (n, 0, 0)),
            scratch_shapes=[
                pltpu.VMEM((9 * Cin, HW), jnp.float32),   # conv1 im2col buffer
                pltpu.VMEM((9 * C1, HW), jnp.float32),    # conv2 im2col buffer
            ],
        ),
        compiler_params=pltpu.CompilerParams(
            dimension_semantics=("parallel",)),
    )(x_flat, masks, w1, g1_, b1_, w2, g2_, b2_)

    return out_flat.reshape(N, C2, H, W)


# ---------------------------- pure-JAX reference -----------------------------
def _ref_double_conv(x_nchw, w1_oihw, g1, b1, w2_oihw, g2, b2, residual):
    dn = ('NCHW', 'OIHW', 'NCHW')

    def gn(h, g, b):
        mean = jnp.mean(h, axis=(1, 2, 3), keepdims=True)
        var = jnp.mean((h - mean) ** 2, axis=(1, 2, 3), keepdims=True)
        hn = (h - mean) / jnp.sqrt(var + 1e-5)
        return hn * g.reshape(1, -1, 1, 1) + b.reshape(1, -1, 1, 1)

    h = jax.lax.conv_general_dilated(x_nchw, w1_oihw, (1, 1),
                                     ((1, 1), (1, 1)), dimension_numbers=dn)
    h = gn(h, g1, b1)
    h = 0.5 * h * (1.0 + jax.lax.erf(h / jnp.sqrt(2.0)))
    h = jax.lax.conv_general_dilated(h, w2_oihw, (1, 1),
                                     ((1, 1), (1, 1)), dimension_numbers=dn)
    h = gn(h, g2, b2)
    return x_nchw + h if residual else h


if __name__ == "__main__":
    key = jax.random.PRNGKey(0)
    k_x, k_w1, k_w2, k_xr, k_w1r, k_w2r = jax.random.split(key, 6)

    # ---- case 1: non-residual, Cin != Cout, exact f32 matmul -----------------
    N, Cin, H, W = 2, 4, 16, 16
    Cout = 8                                    # mid_ch = out_ch (module default)

    x = jax.random.normal(k_x, (N, Cin, H, W), jnp.float32)
    w1_oihw = 0.2 * jax.random.normal(k_w1, (Cout, Cin, 3, 3), jnp.float32)
    w2_oihw = 0.2 * jax.random.normal(k_w2, (Cout, Cout, 3, 3), jnp.float32)
    g1 = 1.0 + 0.05 * jnp.arange(Cout, dtype=jnp.float32)
    b1 = -0.02 * jnp.arange(Cout, dtype=jnp.float32)
    g2 = 1.0 - 0.03 * jnp.arange(Cout, dtype=jnp.float32)
    b2 = 0.01 * jnp.arange(Cout, dtype=jnp.float32)

    out = jax.block_until_ready(
        double_conv(x, w1_oihw, g1, b1, w2_oihw, g2, b2, residual=False))
    ref = _ref_double_conv(x, w1_oihw, g1, b1, w2_oihw, g2, b2, False)
    assert out.shape == (N, Cout, H, W)
    assert jnp.allclose(out, ref, rtol=1e-4, atol=1e-4), \
        f"f32 max abs err = {jnp.max(jnp.abs(out - ref))}"

    # ---- case 2: residual path (requires Cin == Cout) ------------------------
    Cr = 8
    xr = jax.random.normal(k_xr, (N, Cr, H, W), jnp.float32)
    w1r = 0.2 * jax.random.normal(k_w1r, (Cr, Cr, 3, 3), jnp.float32)
    w2r = 0.2 * jax.random.normal(k_w2r, (Cr, Cr, 3, 3), jnp.float32)
    outr = jax.block_until_ready(
        double_conv(xr, w1r, g1, b1, w2r, g2, b2, residual=True))
    refr = _ref_double_conv(xr, w1r, g1, b1, w2r, g2, b2, True)
    assert jnp.allclose(outr, refr, rtol=1e-4, atol=1e-4), \
        f"residual max abs err = {jnp.max(jnp.abs(outr - refr))}"

    # ---- case 3: bf16 MXU operands (f32 accumulation), loose tolerance -------
    out_bf = jax.block_until_ready(
        double_conv(x, w1_oihw, g1, b1, w2_oihw, g2, b2,
                    residual=False, matmul_dtype=jnp.bfloat16))
    assert jnp.allclose(out_bf, ref, rtol=5e-2, atol=1e-1), \
        f"bf16 max abs err = {jnp.max(jnp.abs(out_bf - ref))}"

    print("KERNEL_OK")
</pallas_src>

<mosaic_0001>
module attributes {stable_mosaic.version = 11 : i64} {
  func.func @_double_conv_kernel(%arg0: i32, %arg1: memref<1x4x256xf32, #tpu.memory_space<vmem>>, %arg2: memref<9x256xf32, #tpu.memory_space<vmem>>, %arg3: memref<8x36xf32, #tpu.memory_space<vmem>>, %arg4: memref<8x1xf32, #tpu.memory_space<vmem>>, %arg5: memref<8x1xf32, #tpu.memory_space<vmem>>, %arg6: memref<8x72xf32, #tpu.memory_space<vmem>>, %arg7: memref<8x1xf32, #tpu.memory_space<vmem>>, %arg8: memref<8x1xf32, #tpu.memory_space<vmem>>, %arg9: memref<1x8x256xf32, #tpu.memory_space<vmem>>, %arg10: memref<36x256xf32, #tpu.memory_space<vmem>>, %arg11: memref<72x256xf32, #tpu.memory_space<vmem>>) attributes {dimension_semantics = [#tpu.dimension_semantics<parallel>], iteration_bounds = array<i64: 2>, scalar_prefetch = 0 : i64, scratch_operands = 2 : i64, tpu.core_type = #tpu.core_type<tc>, window_params = [{transform_indices = @transform_0, window_bounds = array<i64: 1, 4, 256>}, {pipeline_mode = #tpu.pipeline_mode<synchronous>, transform_indices = @transform_1, window_bounds = array<i64: 9, 256>}, {pipeline_mode = #tpu.pipeline_mode<synchronous>, transform_indices = @transform_2, window_bounds = array<i64: 8, 36>}, {pipeline_mode = #tpu.pipeline_mode<synchronous>, transform_indices = @transform_3, window_bounds = array<i64: 8, 1>}, {pipeline_mode = #tpu.pipeline_mode<synchronous>, transform_indices = @transform_4, window_bounds = array<i64: 8, 1>}, {pipeline_mode = #tpu.pipeline_mode<synchronous>, transform_indices = @transform_5, window_bounds = array<i64: 8, 72>}, {pipeline_mode = #tpu.pipeline_mode<synchronous>, transform_indices = @transform_6, window_bounds = array<i64: 8, 1>}, {pipeline_mode = #tpu.pipeline_mode<synchronous>, transform_indices = @transform_7, window_bounds = array<i64: 8, 1>}, {transform_indices = @transform_8, window_bounds = array<i64: 1, 8, 256>}]} {
    %c0 = arith.constant 0 : index
    %c0_0 = arith.constant 0 : index
    %c0_1 = arith.constant 0 : index
    %0 = vector.load %arg1[%c0, %c0_0, %c0_1] : memref<1x4x256xf32, #tpu.memory_space<vmem>>, vector<1x4x256xf32>
    %1 = vector.shape_cast %0 : vector<1x4x256xf32> to vector<4x256xf32>
    %c17_i32 = arith.constant 17 : i32
    %2 = tpu.dynamic_rotate %1 by %c17_i32 dim 1 : vector<4x256xf32>, i32 -> vector<4x256xf32>
    %c0_2 = arith.constant 0 : index
    %c0_3 = arith.constant 0 : index
    %3 = vector.load %arg2[%c0_2, %c0_3] : memref<9x256xf32, #tpu.memory_space<vmem>>, vector<1x256xf32>
    %4 = vector.broadcast %3 : vector<1x256xf32> to vector<4x256xf32>
    %5 = arith.mulf %2, %4 : vector<4x256xf32>
    %c0_4 = arith.constant 0 : index
    %c0_5 = arith.constant 0 : index
    %6 = vector.load %arg10[%c0_4, %c0_5] : memref<36x256xf32, #tpu.memory_space<vmem>>, vector<4x256xf32>
    tpu.vector_store %arg10[%c0_4, %c0_5], %5 {strides = array<i32>} : memref<36x256xf32, #tpu.memory_space<vmem>>, vector<4x256xf32>,
    %c16_i32 = arith.constant 16 : i32
    %7 = tpu.dynamic_rotate %1 by %c16_i32 dim 1 : vector<4x256xf32>, i32 -> vector<4x256xf32>
    %c1 = arith.constant 1 : index
    %c0_6 = arith.constant 0 : index
    %8 = vector.load %arg2[%c1, %c0_6] : memref<9x256xf32, #tpu.memory_space<vmem>>, vector<1x256xf32>
    %9 = vector.broadcast %8 : vector<1x256xf32> to vector<4x256xf32>
    %10 = arith.mulf %7, %9 : vector<4x256xf32>
    %c4 = arith.constant 4 : index
    %c0_7 = arith.constant 0 : index
    %11 = vector.load %arg10[%c4, %c0_7] : memref<36x256xf32, #tpu.memory_space<vmem>>, vector<4x256xf32>
    tpu.vector_store %arg10[%c4, %c0_7], %10 {strides = array<i32>} : memref<36x256xf32, #tpu.memory_space<vmem>>, vector<4x256xf32>,
    %c15_i32 = arith.constant 15 : i32
    %12 = tpu.dynamic_rotate %1 by %c15_i32 dim 1 : vector<4x256xf32>, i32 -> vector<4x256xf32>
    %c2 = arith.constant 2 : index
    %c0_8 = arith.constant 0 : index
    %13 = vector.load %arg2[%c2, %c0_8] : memref<9x256xf32, #tpu.memory_space<vmem>>, vector<1x256xf32>
    %14 = vector.broadcast %13 : vector<1x256xf32> to vector<4x256xf32>
    %15 = arith.mulf %12, %14 : vector<4x256xf32>
    %c8 = arith.constant 8 : index
    %c0_9 = arith.constant 0 : index
    %16 = vector.load %arg10[%c8, %c0_9] : memref<36x256xf32, #tpu.memory_space<vmem>>, vector<4x256xf32>
    tpu.vector_store %arg10[%c8, %c0_9], %15 {strides = array<i32>} : memref<36x256xf32, #tpu.memory_space<vmem>>, vector<4x256xf32>,
    %c1_i32 = arith.constant 1 : i32
    %17 = tpu.dynamic_rotate %1 by %c1_i32 dim 1 : vector<4x256xf32>, i32 -> vector<4x256xf32>
    %c3 = arith.constant 3 : index
    %c0_10 = arith.constant 0 : index
    %18 = vector.load %arg2[%c3, %c0_10] : memref<9x256xf32, #tpu.memory_space<vmem>>, vector<1x256xf32>
    %19 = vector.broadcast %18 : vector<1x256xf32> to vector<4x256xf32>
    %20 = arith.mulf %17, %19 : vector<4x256xf32>
    %c12 = arith.constant 12 : index
    %c0_11 = arith.constant 0 : index
    %21 = vector.load %arg10[%c12, %c0_11] : memref<36x256xf32, #tpu.memory_space<vmem>>, vector<4x256xf32>
    tpu.vector_store %arg10[%c12, %c0_11], %20 {strides = array<i32>} : memref<36x256xf32, #tpu.memory_space<vmem>>, vector<4x256xf32>,
    %c16 = arith.constant 16 : index
    %c0_12 = arith.constant 0 : index
    %22 = vector.load %arg10[%c16, %c0_12] : memref<36x256xf32, #tpu.memory_space<vmem>>, vector<4x256xf32>
    tpu.vector_store %arg10[%c16, %c0_12], %1 {strides = array<i32>} : memref<36x256xf32, #tpu.memory_space<vmem>>, vector<4x256xf32>,
    %c255_i32 = arith.constant 255 : i32
    %23 = tpu.dynamic_rotate %1 by %c255_i32 dim 1 : vector<4x256xf32>, i32 -> vector<4x256xf32>
    %c5 = arith.constant 5 : index
    %c0_13 = arith.constant 0 : index
    %24 = vector.load %arg2[%c5, %c0_13] : memref<9x256xf32, #tpu.memory_space<vmem>>, vector<1x256xf32>
    %25 = vector.broadcast %24 : vector<1x256xf32> to vector<4x256xf32>
    %26 = arith.mulf %23, %25 : vector<4x256xf32>
    %c20 = arith.constant 20 : index
    %c0_14 = arith.constant 0 : index
    %27 = vector.load %arg10[%c20, %c0_14] : memref<36x256xf32, #tpu.memory_space<vmem>>, vector<4x256xf32>
    tpu.vector_store %arg10[%c20, %c0_14], %26 {strides = array<i32>} : memref<36x256xf32, #tpu.memory_space<vmem>>, vector<4x256xf32>,
    %c241_i32 = arith.constant 241 : i32
    %28 = tpu.dynamic_rotate %1 by %c241_i32 dim 1 : vector<4x256xf32>, i32 -> vector<4x256xf32>
    %c6 = arith.constant 6 : index
    %c0_15 = arith.constant 0 : index
    %29 = vector.load %arg2[%c6, %c0_15] : memref<9x256xf32, #tpu.memory_space<vmem>>, vector<1x256xf32>
    %30 = vector.broadcast %29 : vector<1x256xf32> to vector<4x256xf32>
    %31 = arith.mulf %28, %30 : vector<4x256xf32>
    %c24 = arith.constant 24 : index
    %c0_16 = arith.constant 0 : index
    %32 = vector.load %arg10[%c24, %c0_16] : memref<36x256xf32, #tpu.memory_space<vmem>>, vector<4x256xf32>
    tpu.vector_store %arg10[%c24, %c0_16], %31 {strides = array<i32>} : memref<36x256xf32, #tpu.memory_space<vmem>>, vector<4x256xf32>,
    %c240_i32 = arith.constant 240 : i32
    %33 = tpu.dynamic_rotate %1 by %c240_i32 dim 1 : vector<4x256xf32>, i32 -> vector<4x256xf32>
    %c7 = arith.constant 7 : index
    %c0_17 = arith.constant 0 : index
    %34 = vector.load %arg2[%c7, %c0_17] : memref<9x256xf32, #tpu.memory_space<vmem>>, vector<1x256xf32>
    %35 = vector.broadcast %34 : vector<1x256xf32> to vector<4x256xf32>
    %36 = arith.mulf %33, %35 : vector<4x256xf32>
    %c28 = arith.constant 28 : index
    %c0_18 = arith.constant 0 : index
    %37 = vector.load %arg10[%c28, %c0_18] : memref<36x256xf32, #tpu.memory_space<vmem>>, vector<4x256xf32>
    tpu.vector_store %arg10[%c28, %c0_18], %36 {strides = array<i32>} : memref<36x256xf32, #tpu.memory_space<vmem>>, vector<4x256xf32>,
    %c239_i32 = arith.constant 239 : i32
    %38 = tpu.dynamic_rotate %1 by %c239_i32 dim 1 : vector<4x256xf32>, i32 -> vector<4x256xf32>
    %c8_19 = arith.constant 8 : index
    %c0_20 = arith.constant 0 : index
    %39 = vector.load %arg2[%c8_19, %c0_20] : memref<9x256xf32, #tpu.memory_space<vmem>>, vector<1x256xf32>
    %40 = vector.broadcast %39 : vector<1x256xf32> to vector<4x256xf32>
    %41 = arith.mulf %38, %40 : vector<4x256xf32>
    %c32 = arith.constant 32 : index
    %c0_21 = arith.constant 0 : index
    %42 = vector.load %arg10[%c32, %c0_21] : memref<36x256xf32, #tpu.memory_space<vmem>>, vector<4x256xf32>
    tpu.vector_store %arg10[%c32, %c0_21], %41 {strides = array<i32>} : memref<36x256xf32, #tpu.memory_space<vmem>>, vector<4x256xf32>,
    %c0_22 = arith.constant 0 : index
    %c0_23 = arith.constant 0 : index
    %43 = vector.load %arg3[%c0_22, %c0_23] : memref<8x36xf32, #tpu.memory_space<vmem>>, vector<8x36xf32>
    %c0_24 = arith.constant 0 : index
    %c0_25 = arith.constant 0 : index
    %44 = vector.load %arg10[%c0_24, %c0_25] : memref<36x256xf32, #tpu.memory_space<vmem>>, vector<36x256xf32>
    %cst = arith.constant dense<0.000000e+00> : vector<8x256xf32>
    %45 = tpu.matmul %43, %44, %cst {dimension_numbers = #tpu.dot_dimension_numbers<[1], [0], [0], [1], [0, 0, 1, 1], [], []>} : vector<8x36xf32>, vector<36x256xf32>, vector<8x256xf32> -> vector<8x256xf32>
    %46 = vector.shape_cast %45 : vector<8x256xf32> to vector<1x8x256xf32>
    %cst_26 = arith.constant dense<0.000000e+00> : vector<1xf32>
    %47 = vector.multi_reduction <add>, %46, %cst_26 [1, 2] : vector<1x8x256xf32> to vector<1xf32>
    %48 = vector.shape_cast %47 : vector<1xf32> to vector<1x1x1xf32>
    %49 = vector.extract %48[0, 0, 0] : f32 from vector<1x1x1xf32>
    %cst_27 = arith.constant 4.8828125E-4 : f32
    %50 = arith.mulf %49, %cst_27 : f32
    %51 = arith.mulf %45, %45 : vector<8x256xf32>
    %52 = vector.shape_cast %51 : vector<8x256xf32> to vector<1x8x256xf32>
    %cst_28 = arith.constant dense<0.000000e+00> : vector<1xf32>
    %53 = vector.multi_reduction <add>, %52, %cst_28 [1, 2] : vector<1x8x256xf32> to vector<1xf32>
    %54 = vector.shape_cast %53 : vector<1xf32> to vector<1x1x1xf32>
    %55 = vector.extract %54[0, 0, 0] : f32 from vector<1x1x1xf32>
    %cst_29 = arith.constant 4.8828125E-4 : f32
    %56 = arith.mulf %55, %cst_29 : f32
    %57 = arith.mulf %50, %50 : f32
    %58 = arith.subf %56, %57 : f32
    %59 = vector.broadcast %50 : f32 to vector<8x256xf32>
    %60 = arith.subf %45, %59 : vector<8x256xf32>
    %cst_30 = arith.constant 9.99999974E-6 : f32
    %61 = arith.addf %58, %cst_30 : f32
    %62 = math.rsqrt %61 : f32
    %63 = vector.broadcast %62 : f32 to vector<8x256xf32>
    %64 = arith.mulf %60, %63 : vector<8x256xf32>
    %c0_31 = arith.constant 0 : index
    %c0_32 = arith.constant 0 : index
    %65 = vector.load %arg4[%c0_31, %c0_32] : memref<8x1xf32, #tpu.memory_space<vmem>>, vector<8x1xf32>
    %66 = vector.broadcast %65 : vector<8x1xf32> to vector<8x256xf32>
    %67 = arith.mulf %64, %66 : vector<8x256xf32>
    %c0_33 = arith.constant 0 : index
    %c0_34 = arith.constant 0 : index
    %68 = vector.load %arg5[%c0_33, %c0_34] : memref<8x1xf32, #tpu.memory_space<vmem>>, vector<8x1xf32>
    %69 = vector.broadcast %68 : vector<8x1xf32> to vector<8x256xf32>
    %70 = arith.addf %67, %69 : vector<8x256xf32>
    %cst_35 = arith.constant 5.000000e-01 : f32
    %71 = vector.broadcast %cst_35 : f32 to vector<8x256xf32>
    %72 = arith.mulf %71, %70 : vector<8x256xf32>
    %cst_36 = arith.constant 0.707106769 : f32
    %73 = vector.broadcast %cst_36 : f32 to vector<8x256xf32>
    %74 = arith.mulf %70, %73 : vector<8x256xf32>
    %75 = math.erf %74 : vector<8x256xf32>
    %cst_37 = arith.constant 1.000000e+00 : f32
    %76 = vector.broadcast %cst_37 : f32 to vector<8x256xf32>
    %77 = arith.addf %76, %75 : vector<8x256xf32>
    %78 = arith.mulf %72, %77 : vector<8x256xf32>
    %c17_i32_38 = arith.constant 17 : i32
    %79 = tpu.dynamic_rotate %78 by %c17_i32_38 dim 1 : vector<8x256xf32>, i32 -> vector<8x256xf32>
    %c0_39 = arith.constant 0 : index
    %c0_40 = arith.constant 0 : index
    %80 = vector.load %arg2[%c0_39, %c0_40] : memref<9x256xf32, #tpu.memory_space<vmem>>, vector<1x256xf32>
    %81 = vector.broadcast %80 : vector<1x256xf32> to vector<8x256xf32>
    %82 = arith.mulf %79, %81 : vector<8x256xf32>
    %c0_41 = arith.constant 0 : index
    %c0_42 = arith.constant 0 : index
    %83 = vector.load %arg11[%c0_41, %c0_42] : memref<72x256xf32, #tpu.memory_space<vmem>>, vector<8x256xf32>
    tpu.vector_store %arg11[%c0_41, %c0_42], %82 {strides = array<i32>} : memref<72x256xf32, #tpu.memory_space<vmem>>, vector<8x256xf32>,
    %c16_i32_43 = arith.constant 16 : i32
    %84 = tpu.dynamic_rotate %78 by %c16_i32_43 dim 1 : vector<8x256xf32>, i32 -> vector<8x256xf32>
    %c1_44 = arith.constant 1 : index
    %c0_45 = arith.constant 0 : index
    %85 = vector.load %arg2[%c1_44, %c0_45] : memref<9x256xf32, #tpu.memory_space<vmem>>, vector<1x256xf32>
    %86 = vector.broadcast %85 : vector<1x256xf32> to vector<8x256xf32>
    %87 = arith.mulf %84, %86 : vector<8x256xf32>
    %c8_46 = arith.constant 8 : index
    %c0_47 = arith.constant 0 : index
    %88 = vector.load %arg11[%c8_46, %c0_47] : memref<72x256xf32, #tpu.memory_space<vmem>>, vector<8x256xf32>
    tpu.vector_store %arg11[%c8_46, %c0_47], %87 {strides = array<i32>} : memref<72x256xf32, #tpu.memory_space<vmem>>, vector<8x256xf32>,
    %c15_i32_48 = arith.constant 15 : i32
    %89 = tpu.dynamic_rotate %78 by %c15_i32_48 dim 1 : vector<8x256xf32>, i32 -> vector<8x256xf32>
    %c2_49 = arith.constant 2 : index
    %c0_50 = arith.constant 0 : index
    %90 = vector.load %arg2[%c2_49, %c0_50] : memref<9x256xf32, #tpu.memory_space<vmem>>, vector<1x256xf32>
    %91 = vector.broadcast %90 : vector<1x256xf32> to vector<8x256xf32>
    %92 = arith.mulf %89, %91 : vector<8x256xf32>
    %c16_51 = arith.constant 16 : index
    %c0_52 = arith.constant 0 : index
    %93 = vector.load %arg11[%c16_51, %c0_52] : memref<72x256xf32, #tpu.memory_space<vmem>>, vector<8x256xf32>
    tpu.vector_store %arg11[%c16_51, %c0_52], %92 {strides = array<i32>} : memref<72x256xf32, #tpu.memory_space<vmem>>, vector<8x256xf32>,
    %c1_i32_53 = arith.constant 1 : i32
    %94 = tpu.dynamic_rotate %78 by %c1_i32_53 dim 1 : vector<8x256xf32>, i32 -> vector<8x256xf32>
    %c3_54 = arith.constant 3 : index
    %c0_55 = arith.constant 0 : index
    %95 = vector.load %arg2[%c3_54, %c0_55] : memref<9x256xf32, #tpu.memory_space<vmem>>, vector<1x256xf32>
    %96 = vector.broadcast %95 : vector<1x256xf32> to vector<8x256xf32>
    %97 = arith.mulf %94, %96 : vector<8x256xf32>
    %c24_56 = arith.constant 24 : index
    %c0_57 = arith.constant 0 : index
    %98 = vector.load %arg11[%c24_56, %c0_57] : memref<72x256xf32, #tpu.memory_space<vmem>>, vector<8x256xf32>
    tpu.vector_store %arg11[%c24_56, %c0_57], %97 {strides = array<i32>} : memref<72x256xf32, #tpu.memory_space<vmem>>, vector<8x256xf32>,
    %c32_58 = arith.constant 32 : index
    %c0_59 = arith.constant 0 : index
    %99 = vector.load %arg11[%c32_58, %c0_59] : memref<72x256xf32, #tpu.memory_space<vmem>>, vector<8x256xf32>
    tpu.vector_store %arg11[%c32_58, %c0_59], %78 {strides = array<i32>} : memref<72x256xf32, #tpu.memory_space<vmem>>, vector<8x256xf32>,
    %c255_i32_60 = arith.constant 255 : i32
    %100 = tpu.dynamic_rotate %78 by %c255_i32_60 dim 1 : vector<8x256xf32>, i32 -> vector<8x256xf32>
    %c5_61 = arith.constant 5 : index
    %c0_62 = arith.constant 0 : index
    %101 = vector.load %arg2[%c5_61, %c0_62] : memref<9x256xf32, #tpu.memory_space<vmem>>, vector<1x256xf32>
    %102 = vector.broadcast %101 : vector<1x256xf32> to vector<8x256xf32>
    %103 = arith.mulf %100, %102 : vector<8x256xf32>
    %c40 = arith.constant 40 : index
    %c0_63 = arith.constant 0 : index
    %104 = vector.load %arg11[%c40, %c0_63] : memref<72x256xf32, #tpu.memory_space<vmem>>, vector<8x256xf32>
    tpu.vector_store %arg11[%c40, %c0_63], %103 {strides = array<i32>} : memref<72x256xf32, #tpu.memory_space<vmem>>, vector<8x256xf32>,
    %c241_i32_64 = arith.constant 241 : i32
    %105 = tpu.dynamic_rotate %78 by %c241_i32_64 dim 1 : vector<8x256xf32>, i32 -> vector<8x256xf32>
    %c6_65 = arith.constant 6 : index
    %c0_66 = arith.constant 0 : index
    %106 = vector.load %arg2[%c6_65, %c0_66] : memref<9x256xf32, #tpu.memory_space<vmem>>, vector<1x256xf32>
    %107 = vector.broadcast %106 : vector<1x256xf32> to vector<8x256xf32>
    %108 = arith.mulf %105, %107 : vector<8x256xf32>
    %c48 = arith.constant 48 : index
    %c0_67 = arith.constant 0 : index
    %109 = vector.load %arg11[%c48, %c0_67] : memref<72x256xf32, #tpu.memory_space<vmem>>, vector<8x256xf32>
    tpu.vector_store %arg11[%c48, %c0_67], %108 {strides = array<i32>} : memref<72x256xf32, #tpu.memory_space<vmem>>, vector<8x256xf32>,
    %c240_i32_68 = arith.constant 240 : i32
    %110 = tpu.dynamic_rotate %78 by %c240_i32_68 dim 1 : vector<8x256xf32>, i32 -> vector<8x256xf32>
    %c7_69 = arith.constant 7 : index
    %c0_70 = arith.constant 0 : index
    %111 = vector.load %arg2[%c7_69, %c0_70] : memref<9x256xf32, #tpu.memory_space<vmem>>, vector<1x256xf32>
    %112 = vector.broadcast %111 : vector<1x256xf32> to vector<8x256xf32>
    %113 = arith.mulf %110, %112 : vector<8x256xf32>
    %c56 = arith.constant 56 : index
    %c0_71 = arith.constant 0 : index
    %114 = vector.load %arg11[%c56, %c0_71] : memref<72x256xf32, #tpu.memory_space<vmem>>, vector<8x256xf32>
    tpu.vector_store %arg11[%c56, %c0_71], %113 {strides = array<i32>} : memref<72x256xf32, #tpu.memory_space<vmem>>, vector<8x256xf32>,
    %c239_i32_72 = arith.constant 239 : i32
    %115 = tpu.dynamic_rotate %78 by %c239_i32_72 dim 1 : vector<8x256xf32>, i32 -> vector<8x256xf32>
    %c8_73 = arith.constant 8 : index
    %c0_74 = arith.constant 0 : index
    %116 = vector.load %arg2[%c8_73, %c0_74] : memref<9x256xf32, #tpu.memory_space<vmem>>, vector<1x256xf32>
    %117 = vector.broadcast %116 : vector<1x256xf32> to vector<8x256xf32>
    %118 = arith.mulf %115, %117 : vector<8x256xf32>
    %c64 = arith.constant 64 : index
    %c0_75 = arith.constant 0 : index
    %119 = vector.load %arg11[%c64, %c0_75] : memref<72x256xf32, #tpu.memory_space<vmem>>, vector<8x256xf32>
    tpu.vector_store %arg11[%c64, %c0_75], %118 {strides = array<i32>} : memref<72x256xf32, #tpu.memory_space<vmem>>, vector<8x256xf32>,
    %c0_76 = arith.constant 0 : index
    %c0_77 = arith.constant 0 : index
    %120 = vector.load %arg6[%c0_76, %c0_77] : memref<8x72xf32, #tpu.memory_space<vmem>>, vector<8x72xf32>
    %c0_78 = arith.constant 0 : index
    %c0_79 = arith.constant 0 : index
    %121 = vector.load %arg11[%c0_78, %c0_79] : memref<72x256xf32, #tpu.memory_space<vmem>>, vector<72x256xf32>
    %cst_80 = arith.constant dense<0.000000e+00> : vector<8x256xf32>
    %122 = tpu.matmul %120, %121, %cst_80 {dimension_numbers = #tpu.dot_dimension_numbers<[1], [0], [0], [1], [0, 0, 1, 1], [], []>} : vector<8x72xf32>, vector<72x256xf32>, vector<8x256xf32> -> vector<8x256xf32>
    %123 = vector.shape_cast %122 : vector<8x256xf32> to vector<1x8x256xf32>
    %cst_81 = arith.constant dense<0.000000e+00> : vector<1xf32>
    %124 = vector.multi_reduction <add>, %123, %cst_81 [1, 2] : vector<1x8x256xf32> to vector<1xf32>
    %125 = vector.shape_cast %124 : vector<1xf32> to vector<1x1x1xf32>
    %126 = vector.extract %125[0, 0, 0] : f32 from vector<1x1x1xf32>
    %cst_82 = arith.constant 4.8828125E-4 : f32
    %127 = arith.mulf %126, %cst_82 : f32
    %128 = arith.mulf %122, %122 : vector<8x256xf32>
    %129 = vector.shape_cast %128 : vector<8x256xf32> to vector<1x8x256xf32>
    %cst_83 = arith.constant dense<0.000000e+00> : vector<1xf32>
    %130 = vector.multi_reduction <add>, %129, %cst_83 [1, 2] : vector<1x8x256xf32> to vector<1xf32>
    %131 = vector.shape_cast %130 : vector<1xf32> to vector<1x1x1xf32>
    %132 = vector.extract %131[0, 0, 0] : f32 from vector<1x1x1xf32>
    %cst_84 = arith.constant 4.8828125E-4 : f32
    %133 = arith.mulf %132, %cst_84 : f32
    %134 = arith.mulf %127, %127 : f32
    %135 = arith.subf %133, %134 : f32
    %136 = vector.broadcast %127 : f32 to vector<8x256xf32>
    %137 = arith.subf %122, %136 : vector<8x256xf32>
    %cst_85 = arith.constant 9.99999974E-6 : f32
    %138 = arith.addf %135, %cst_85 : f32
    %139 = math.rsqrt %138 : f32
    %140 = vector.broadcast %139 : f32 to vector<8x256xf32>
    %141 = arith.mulf %137, %140 : vector<8x256xf32>
    %c0_86 = arith.constant 0 : index
    %c0_87 = arith.constant 0 : index
    %142 = vector.load %arg7[%c0_86, %c0_87] : memref<8x1xf32, #tpu.memory_space<vmem>>, vector<8x1xf32>
    %143 = vector.broadcast %142 : vector<8x1xf32> to vector<8x256xf32>
    %144 = arith.mulf %141, %143 : vector<8x256xf32>
    %c0_88 = arith.constant 0 : index
    %c0_89 = arith.constant 0 : index
    %145 = vector.load %arg8[%c0_88, %c0_89] : memref<8x1xf32, #tpu.memory_space<vmem>>, vector<8x1xf32>
    %146 = vector.broadcast %145 : vector<8x1xf32> to vector<8x256xf32>
    %147 = arith.addf %144, %146 : vector<8x256xf32>
    %c0_90 = arith.constant 0 : index
    %c0_91 = arith.constant 0 : index
    %c0_92 = arith.constant 0 : index
    %148 = vector.load %arg9[%c0_90, %c0_91, %c0_92] : memref<1x8x256xf32, #tpu.memory_space<vmem>>, vector<1x8x256xf32>
    %149 = vector.shape_cast %148 : vector<1x8x256xf32> to vector<8x256xf32>
    %150 = vector.shape_cast %147 : vector<8x256xf32> to vector<1x8x256xf32>
    tpu.vector_store %arg9[%c0_90, %c0_91, %c0_92], %150 {strides = array<i32>} : memref<1x8x256xf32, #tpu.memory_space<vmem>>, vector<1x8x256xf32>,
    return
  }
  func.func @transform_0(%arg0: i32) -> (i32, i32, i32) {
    %c0_i32 = arith.constant 0 : i32
    %c0_i32_0 = arith.constant 0 : i32
    %c0_i32_1 = arith.constant 0 : i32
    return %arg0, %c0_i32, %c0_i32_0 : i32, i32, i32
  }
  func.func @transform_1(%arg0: i32) -> (i32, i32) {
    %c0_i32 = arith.constant 0 : i32
    %c0_i32_0 = arith.constant 0 : i32
    %c0_i32_1 = arith.constant 0 : i32
    return %c0_i32, %c0_i32_0 : i32, i32
  }
  func.func @transform_2(%arg0: i32) -> (i32, i32) {
    %c0_i32 = arith.constant 0 : i32
    %c0_i32_0 = arith.constant 0 : i32
    %c0_i32_1 = arith.constant 0 : i32
    return %c0_i32, %c0_i32_0 : i32, i32
  }
  func.func @transform_3(%arg0: i32) -> (i32, i32) {
    %c0_i32 = arith.constant 0 : i32
    %c0_i32_0 = arith.constant 0 : i32
    %c0_i32_1 = arith.constant 0 : i32
    return %c0_i32, %c0_i32_0 : i32, i32
  }
  func.func @transform_4(%arg0: i32) -> (i32, i32) {
    %c0_i32 = arith.constant 0 : i32
    %c0_i32_0 = arith.constant 0 : i32
    %c0_i32_1 = arith.constant 0 : i32
    return %c0_i32, %c0_i32_0 : i32, i32
  }
  func.func @transform_5(%arg0: i32) -> (i32, i32) {
    %c0_i32 = arith.constant 0 : i32
    %c0_i32_0 = arith.constant 0 : i32
    %c0_i32_1 = arith.constant 0 : i32
    return %c0_i32, %c0_i32_0 : i32, i32
  }
  func.func @transform_6(%arg0: i32) -> (i32, i32) {
    %c0_i32 = arith.constant 0 : i32
    %c0_i32_0 = arith.constant 0 : i32
    %c0_i32_1 = arith.constant 0 : i32
    return %c0_i32, %c0_i32_0 : i32, i32
  }
  func.func @transform_7(%arg0: i32) -> (i32, i32) {
    %c0_i32 = arith.constant 0 : i32
    %c0_i32_0 = arith.constant 0 : i32
    %c0_i32_1 = arith.constant 0 : i32
    return %c0_i32, %c0_i32_0 : i32, i32
  }
  func.func @transform_8(%arg0: i32) -> (i32, i32, i32) {
    %c0_i32 = arith.constant 0 : i32
    %c0_i32_0 = arith.constant 0 : i32
    %c0_i32_1 = arith.constant 0 : i32
    return %arg0, %c0_i32, %c0_i32_0 : i32, i32, i32
  }
}

</mosaic_0001>

<llo_original>
// kernel: tpu_custom_call.1
$region0: #{tpu_custom_call.1}
  #allocation0 [shape = 'u32[]', space=smem, size = 0x4, offset = 0x4, fixed_abs, tag = 'smem constant byte address 0x4 - core index']
  #allocation1 [shape = 'u32[72,128]{1,0:T(1,128)}', space=vmem, size = 0x9000, scoped, tag = 'internal scratch']
  #allocation2 [shape = 'f32[36,256]{1,0:T(8,128)}', space=vmem, size = 0xa000, scoped, tag = 'scratch operand']
  #allocation3 [shape = 'f32[72,256]{1,0:T(8,128)}', space=vmem, size = 0x12000, scoped, tag = 'scratch operand']
  %s0 = inlined_call_operand.vmem [shape: f32[2,4,256], index: 0, kind: input, shape index: {}]
  %s1 = inlined_call_operand.hbm [shape: f32[9,256], index: 1, kind: input, shape index: {}]
  %s2 = inlined_call_operand.vmem [shape: f32[8,36], index: 2, kind: input, shape index: {}]
  %s3 = inlined_call_operand.vmem [shape: f32[8,1], index: 3, kind: input, shape index: {}]
  %s4 = inlined_call_operand.vmem [shape: f32[8,1], index: 4, kind: input, shape index: {}]
  %s5 = inlined_call_operand.vmem [shape: f32[8,72], index: 5, kind: input, shape index: {}]
  %s6 = inlined_call_operand.vmem [shape: f32[8,1], index: 6, kind: input, shape index: {}]
  %s7 = inlined_call_operand.vmem [shape: f32[8,1], index: 7, kind: input, shape index: {}]
  %s8 = inlined_call_operand.hbm [shape: f32[2,8,256], index: 8, kind: output, shape index: {}]
  %s9 = sld [smem:[#allocation0]]
  $region69: #{tpu_custom_call.1} parent=0
    _
  %s11 = ssub.s32 1, %s9
  %s12 = scalar_select 0, %s11, %s9
  $region1: #{tpu_custom_call.1} parent=0
    #allocation4 [shape = 'u8[16384]{0}', space=vmem, size = 0x4000, scoped, tag = 'input window, operand 1, single buffered']
    #allocation5 [shape = 's32[2]{0}', space=sflag, size = 0x8, scoped, tag = 'scoped memory for tpu_custom_call.1']
    #allocation6 [shape = 's32[2]{0}', space=sflag, size = 0x8, scoped, tag = 'scoped memory for tpu_custom_call.1']
    #allocation7 [shape = 'u8[16384]{0}', space=vmem, size = 0x4000, scoped, tag = 'output window, operand 0']
    %13 = vsyncpa [#allocation5], 0
    %14 = vsyncpa [#allocation6], 0
    %s15 = scalar_lea.sflag [#allocation6], 1
    %16 = vsyncpa %s15, 0
    loop: start=0, step=1, limit=4
    $region2: #{tpu_custom_call.1} parent=1 // loop_pre_header
      _
    $region3: #{tpu_custom_call.1} parent=1 // loop_header
      %s18 = sphi 0, %s22
      %p19 = scmp.ge.s32.totalorder %s18, 4
      %s28 = sphi 0, %s30
      %s31 = sphi 0, %s28
      %s32 = sphi 0, %s31
      %s48 = sphi 0, %s32
      %s52 = sphi 0, %s52
      %s54 = sphi 0, %s52
      %s55 = sphi 0, %s54
      %s69 = sphi 0, %s55
      %s73 = sphi 0, %s73
      %s75 = sphi 0, %s73
      %s76 = sphi 0, %s75
      %s90 = sphi 0, %s76
      %s94 = sphi 0, %s94
      %s96 = sphi 0, %s94
      %s97 = sphi 0, %s96
      %s111 = sphi 0, %s97
      %s115 = sphi 0, %s115
      %s117 = sphi 0, %s115
      %s118 = sphi 0, %s117
      %s132 = sphi 0, %s118
      %s136 = sphi 0, %s136
      %s138 = sphi 0, %s136
      %s139 = sphi 0, %s138
      %s153 = sphi 0, %s139
      %s157 = sphi 0, %s157
      %s159 = sphi 0, %s157
      %s160 = sphi 0, %s159
      %s174 = sphi 0, %s160
      %s178 = sphi 0, %s178
      %s180 = sphi 0, %s178
      %s181 = sphi 0, %s180
      %s195 = sphi 0, %s181
      %s201 = sphi 0, %s203
      %s204 = sphi 0, %s201
      %s205 = sphi 0, %s204
      %s221 = sphi 0, %s205
    $region4: #{tpu_custom_call.1} parent=1 // loop_header_branch
      %21 = sbr.rel (%p19) target = $region8
    $region5: #{tpu_custom_call.1} parent=1 // loop_body
      %s23 = ssub.s32 %s18, 1
      %s24 = ssub.s32 %s18, 2
      %s25 = sadd.s32 %s18, 1
      %s26 = ssub.s32 %s18, %s25
      %p27 = scmp.eq.s32.totalorder %s26, 0
      %s29 = sadd.s32 %s28, 1
      %s30 = scalar_select %p27, %s28, %s29
      %p33 = pneg %p27
      %p34 = scmp.eq.s32.totalorder %s18, 1
      %p35 = por %p33, %p34
      %p36 = scmp.ne.s32.totalorder %s28, %s31
      %p37 = scmp.eq.s32.totalorder %s18, 0
      %p38 = por %p36, %p37
      %p39 = scmp.ne.s32.totalorder %s28, %s31
      %p40 = scmp.eq.s32.totalorder %s23, 1
      %p41 = por %p39, %p40
      %p42 = scmp.ne.s32.totalorder %s31, %s32
      %p43 = scmp.eq.s32.totalorder %s23, 0
      %p44 = por %p42, %p43
      %p45 = scmp.ne.s32.totalorder %s31, %s32
      %p46 = scmp.eq.s32.totalorder %s24, 1
      %p47 = por %p45, %p46
      %p49 = scmp.ne.s32.totalorder %s32, %s48
      %p50 = scmp.eq.s32.totalorder %s24, 0
      %p51 = por %p49, %p50
      %s53 = sadd.s32 %s52, 1
      %p56 = scmp.eq.s32.totalorder %s18, 1
      %p57 = scmp.ne.s32.totalorder %s52, %s54
      %p58 = scmp.eq.s32.totalorder %s18, 0
      %p59 = por %p57, %p58
      %p60 = scmp.ne.s32.totalorder %s52, %s54
      %p61 = scmp.eq.s32.totalorder %s23, 1
      %p62 = por %p60, %p61
      %p63 = scmp.ne.s32.totalorder %s54, %s55
      %p64 = scmp.eq.s32.totalorder %s23, 0
      %p65 = por %p63, %p64
      %p66 = scmp.ne.s32.totalorder %s54, %s55
      %p67 = scmp.eq.s32.totalorder %s24, 1
      %p68 = por %p66, %p67
      %p70 = scmp.ne.s32.totalorder %s55, %s69
      %p71 = scmp.eq.s32.totalorder %s24, 0
      %p72 = por %p70, %p71
      %s74 = sadd.s32 %s73, 1
      %p77 = scmp.eq.s32.totalorder %s18, 1
      %p78 = scmp.ne.s32.totalorder %s73, %s75
      %p79 = scmp.eq.s32.totalorder %s18, 0
      %p80 = por %p78, %p79
      %p81 = scmp.ne.s32.totalorder %s73, %s75
      %p82 = scmp.eq.s32.totalorder %s23, 1
      %p83 = por %p81, %p82
      %p84 = scmp.ne.s32.totalorder %s75, %s76
      %p85 = scmp.eq.s32.totalorder %s23, 0
      %p86 = por %p84, %p85
      %p87 = scmp.ne.s32.totalorder %s75, %s76
      %p88 = scmp.eq.s32.totalorder %s24, 1
      %p89 = por %p87, %p88
      %p91 = scmp.ne.s32.totalorder %s76, %s90
      %p92 = scmp.eq.s32.totalorder %s24, 0
      %p93 = por %p91, %p92
      %s95 = sadd.s32 %s94, 1
      %p98 = scmp.eq.s32.totalorder %s18, 1
      %p99 = scmp.ne.s32.totalorder %s94, %s96
      %p100 = scmp.eq.s32.totalorder %s18, 0
      %p101 = por %p99, %p100
      %p102 = scmp.ne.s32.totalorder %s94, %s96
      %p103 = scmp.eq.s32.totalorder %s23, 1
      %p104 = por %p102, %p103
      %p105 = scmp.ne.s32.totalorder %s96, %s97
      %p106 = scmp.eq.s32.totalorder %s23, 0
      %p107 = por %p105, %p106
      %p108 = scmp.ne.s32.totalorder %s96, %s97
      %p109 = scmp.eq.s32.totalorder %s24, 1
      %p110 = por %p108, %p109
      %p112 = scmp.ne.s32.totalorder %s97, %s111
      %p113 = scmp.eq.s32.totalorder %s24, 0
      %p114 = por %p112, %p113
      %s116 = sadd.s32 %s115, 1
      %p119 = scmp.eq.s32.totalorder %s18, 1
      %p120 = scmp.ne.s32.totalorder %s115, %s117
      %p121 = scmp.eq.s32.totalorder %s18, 0
      %p122 = por %p120, %p121
      %p123 = scmp.ne.s32.totalorder %s115, %s117
      %p124 = scmp.eq.s32.totalorder %s23, 1
      %p125 = por %p123, %p124
      %p126 = scmp.ne.s32.totalorder %s117, %s118
      %p127 = scmp.eq.s32.totalorder %s23, 0
      %p128 = por %p126, %p127
      %p129 = scmp.ne.s32.totalorder %s117, %s118
      %p130 = scmp.eq.s32.totalorder %s24, 1
      %p131 = por %p129, %p130
      %p133 = scmp.ne.s32.totalorder %s118, %s132
      %p134 = scmp.eq.s32.totalorder %s24, 0
      %p135 = por %p133, %p134
      %s137 = sadd.s32 %s136, 1
      %p140 = scmp.eq.s32.totalorder %s18, 1
      %p141 = scmp.ne.s32.totalorder %s136, %s138
      %p142 = scmp.eq.s32.totalorder %s18, 0
      %p143 = por %p141, %p142
      %p144 = scmp.ne.s32.totalorder %s136, %s138
      %p145 = scmp.eq.s32.totalorder %s23, 1
      %p146 = por %p144, %p145
      %p147 = scmp.ne.s32.totalorder %s138, %s139
      %p148 = scmp.eq.s32.totalorder %s23, 0
      %p149 = por %p147, %p148
      %p150 = scmp.ne.s32.totalorder %s138, %s139
      %p151 = scmp.eq.s32.totalorder %s24, 1
      %p152 = por %p150, %p151
      %p154 = scmp.ne.s32.totalorder %s139, %s153
      %p155 = scmp.eq.s32.totalorder %s24, 0
      %p156 = por %p154, %p155
      %s158 = sadd.s32 %s157, 1
      %p161 = scmp.eq.s32.totalorder %s18, 1
      %p162 = scmp.ne.s32.totalorder %s157, %s159
      %p163 = scmp.eq.s32.totalorder %s18, 0
      %p164 = por %p162, %p163
      %p165 = scmp.ne.s32.totalorder %s157, %s159
      %p166 = scmp.eq.s32.totalorder %s23, 1
      %p167 = por %p165, %p166
      %p168 = scmp.ne.s32.totalorder %s159, %s160
      %p169 = scmp.eq.s32.totalorder %s23, 0
      %p170 = por %p168, %p169
      %p171 = scmp.ne.s32.totalorder %s159, %s160
      %p172 = scmp.eq.s32.totalorder %s24, 1
      %p173 = por %p171, %p172
      %p175 = scmp.ne.s32.totalorder %s160, %s174
      %p176 = scmp.eq.s32.totalorder %s24, 0
      %p177 = por %p175, %p176
      %s179 = sadd.s32 %s178, 1
      %p182 = scmp.eq.s32.totalorder %s18, 1
      %p183 = scmp.ne.s32.totalorder %s178, %s180
      %p184 = scmp.eq.s32.totalorder %s18, 0
      %p185 = por %p183, %p184
      %p186 = scmp.ne.s32.totalorder %s178, %s180
      %p187 = scmp.eq.s32.totalorder %s23, 1
      %p188 = por %p186, %p187
      %p189 = scmp.ne.s32.totalorder %s180, %s181
      %p190 = scmp.eq.s32.totalorder %s23, 0
      %p191 = por %p189, %p190
      %p192 = scmp.ne.s32.totalorder %s180, %s181
      %p193 = scmp.eq.s32.totalorder %s24, 1
      %p194 = por %p192, %p193
      %p196 = scmp.ne.s32.totalorder %s181, %s195
      %p197 = scmp.eq.s32.totalorder %s24, 0
      %p198 = por %p196, %p197
      %s199 = ssub.s32 %s18, %s25
      %p200 = scmp.eq.s32.totalorder %s199, 0
      %s202 = sadd.s32 %s201, 1
      %s203 = scalar_select %p200, %s201, %s202
      %p206 = pneg %p200
      %p207 = scmp.eq.s32.totalorder %s18, 1
      %p208 = por %p206, %p207
      %p209 = scmp.ne.s32.totalorder %s201, %s204
      %p210 = scmp.eq.s32.totalorder %s18, 0
      %p211 = por %p209, %p210
      %p212 = scmp.ne.s32.totalorder %s201, %s204
      %p213 = scmp.eq.s32.totalorder %s23, 1
      %p214 = por %p212, %p213
      %p215 = scmp.ne.s32.totalorder %s204, %s205
      %p216 = scmp.eq.s32.totalorder %s23, 0
      %p217 = por %p215, %p216
      %p218 = scmp.ne.s32.totalorder %s204, %s205
      %p219 = scmp.eq.s32.totalorder %s24, 1
      %p220 = por %p218, %p219
      %p222 = scmp.ne.s32.totalorder %s205, %s221
      %p223 = scmp.eq.s32.totalorder %s24, 0
      %p224 = por %p222, %p223
      %p225 = scmp.le.s32.totalorder 1, %s18
      %p226 = scmp.lt.s32.totalorder %s18, 3
      %p227 = pnand %p225, %p226
      %p228 = pneg %p227
      // Predicated region
      $region9: #{tpu_custom_call.1} parent=5 // pred_check
        _
      $region10: #{tpu_custom_call.1} parent=5 // pred_check_branch
        %230 = sbr.rel (%p227) target = $region12
      $region11: #{tpu_custom_call.1} parent=5 // pred_region
        %s231 = ssub.s32 %s18, 1
        // Predicated region
        $region13: #{tpu_custom_call.1} parent=11 // pred_check
          %p232 = pneg %p65
        $region14: #{tpu_custom_call.1} parent=11 // pred_check_branch
          %234 = sbr.rel (%p232) target = $region16
        $region15: #{tpu_custom_call.1} parent=11 // pred_region
          %236 = vsyncadd [#allocation5], 0
          %s237 = sshll.u32 %s1, 4
          %s238 = int_to_ptr.hbm [resolvable:$true] %s237
          %s239 = sshll.u32 [#allocation4], 4
          %s240 = int_to_ptr.vmem [resolvable:$true] %s239
          %245 = dma.hbm_to_vmem [thread:$0]  %s238, 512, %s240, [#allocation5], 256, 256, 16
        $region16: #{tpu_custom_call.1} parent=11 // pred_fallthru
          _
        // Predicated region
        $region17: #{tpu_custom_call.1} parent=11 // pred_check
          %p246 = pneg %p86
        $region18: #{tpu_custom_call.1} parent=11 // pred_check_branch
          %248 = sbr.rel (%p246) target = $region20
        $region19: #{tpu_custom_call.1} parent=11 // pred_region
          _
        $region20: #{tpu_custom_call.1} parent=11 // pred_fallthru
          _
        // Predicated region
        $region21: #{tpu_custom_call.1} parent=11 // pred_check
          %p249 = pneg %p107
        $region22: #{tpu_custom_call.1} parent=11 // pred_check_branch
          %251 = sbr.rel (%p249) target = $region24
        $region23: #{tpu_custom_call.1} parent=11 // pred_region
          _
        $region24: #{tpu_custom_call.1} parent=11 // pred_fallthru
          _
        // Predicated region
        $region25: #{tpu_custom_call.1} parent=11 // pred_check
          %p252 = pneg %p128
        $region26: #{tpu_custom_call.1} parent=11 // pred_check_branch
          %254 = sbr.rel (%p252) target = $region28
        $region27: #{tpu_custom_call.1} parent=11 // pred_region
          _
        $region28: #{tpu_custom_call.1} parent=11 // pred_fallthru
          _
        // Predicated region
        $region29: #{tpu_custom_call.1} parent=11 // pred_check
          %p255 = pneg %p149
        $region30: #{tpu_custom_call.1} parent=11 // pred_check_branch
          %257 = sbr.rel (%p255) target = $region32
        $region31: #{tpu_custom_call.1} parent=11 // pred_region
          _
        $region32: #{tpu_custom_call.1} parent=11 // pred_fallthru
          _
        // Predicated region
        $region33: #{tpu_custom_call.1} parent=11 // pred_check
          %p258 = pneg %p170
        $region34: #{tpu_custom_call.1} parent=11 // pred_check_branch
          %260 = sbr.rel (%p258) target = $region36
        $region35: #{tpu_custom_call.1} parent=11 // pred_region
          _
        $region36: #{tpu_custom_call.1} parent=11 // pred_fallthru
          _
        // Predicated region
        $region37: #{tpu_custom_call.1} parent=11 // pred_check
          %p261 = pneg %p191
        $region38: #{tpu_custom_call.1} parent=11 // pred_check_branch
          %263 = sbr.rel (%p261) target = $region40
        $region39: #{tpu_custom_call.1} parent=11 // pred_region
          _
        $region40: #{tpu_custom_call.1} parent=11 // pred_fallthru
          _
      $region12: #{tpu_custom_call.1} parent=5 // pred_fallthru
        _
      %p264 = scmp.lt.s32.totalorder %s18, 2
      // Predicated region
      $region41: #{tpu_custom_call.1} parent=5 // pred_check
        %p265 = pneg %p264
      $region42: #{tpu_custom_call.1} parent=5 // pred_check_branch
        %267 = sbr.rel (%p265) target = $region44
      $region43: #{tpu_custom_call.1} parent=5 // pred_region
        // Predicated region
        $region45: #{tpu_custom_call.1} parent=43 // pred_check
          %p268 = pneg %p38
        $region46: #{tpu_custom_call.1} parent=43 // pred_check_branch
          %270 = sbr.rel (%p268) target = $region48
        $region47: #{tpu_custom_call.1} parent=43 // pred_region
          %p271 = scmp.lt.s32.totalorder %s18, 1
          %s272 = scalar_select %p271, %s18, 1
          %s273 = smul.addr %s272, 2
          %s274 = smul.addr %s273, 4
          %s275 = scalar_lea.vmem %s0, %s274
        $region48: #{tpu_custom_call.1} parent=43 // pred_fallthru
          _
      $region44: #{tpu_custom_call.1} parent=5 // pred_fallthru
        _
      %p276 = scmp.le.s32.totalorder 1, %s18
      %p277 = scmp.lt.s32.totalorder %s18, 3
      %p278 = pnand %p276, %p277
      %p279 = pneg %p278
      // Predicated region
      $region49: #{tpu_custom_call.1} parent=5 // pred_check
        _
      $region50: #{tpu_custom_call.1} parent=5 // pred_check_branch
        %281 = sbr.rel (%p278) target = $region52
      $region51: #{tpu_custom_call.1} parent=5 // pred_region
        %s282 = ssub.s32 %s18, 1
        // Predicated region
        $region53: #{tpu_custom_call.1} parent=51 // pred_check
          %p283 = pneg %p65
        $region54: #{tpu_custom_call.1} parent=51 // pred_check_branch
          %285 = sbr.rel (%p283) target = $region56
        $region55: #{tpu_custom_call.1} parent=51 // pred_region
          %287 = dma.done [#allocation5], 512
        $region56: #{tpu_custom_call.1} parent=51 // pred_fallthru
          _
        %p288 = scmp.lt.s32.totalorder %s23, 1
        %s289 = scalar_select %p288, %s23, 1
        %s290 = smul.addr %s289, 2
        %s291 = smul.addr %s290, 4
        %s292 = scalar_lea.vmem %s0, %s291
        %p293 = pneg %p44
        %p294 = pneg %p41
        %p295 = pneg %p65
        %p296 = pneg %p62
        %p297 = pneg %p86
        %p298 = pneg %p83
        %p299 = pneg %p107
        %p300 = pneg %p104
        %p301 = pneg %p128
        %p302 = pneg %p125
        %p303 = pneg %p149
        %p304 = pneg %p146
        %p305 = pneg %p170
        %p306 = pneg %p167
        %p307 = pneg %p191
        %p308 = pneg %p188
        %p309 = pneg %p217
        %p310 = pneg %p214
        %s311 = sand.u32 %s204, 1
        %s312 = scalar_lea.sflag [#allocation6], %s311
        %s313 = sand.u32 %s204, 1
        %s314 = smul.addr %s313, 16
        %s315 = scalar_lea.vmem [#allocation7], %s314
        %p316 = scmp.lt.s32.totalorder %s23, 1
        %s317 = scalar_select %p316, %s23, 1
        %s318 = smul.addr %s317, 2
        %s319 = smul.addr %s318, 4
        %s320 = scalar_lea.vmem %s0, %s319
        %v321 = vld [vmem:[%s320] sm:$0xff]
        %323 = vst [vmem:[#allocation1] ss:$2 sm:$0xff] %v321
        %v324 = vld.sshfl [vmem:[#allocation1] sm:$0xff pattern:$0x75316420]
        %v325 = vld.sshfl [vmem:[#allocation1 + $0x8] sm:$0xff pattern:$0x75316420]
        %328 = vrot.lane.b32.xlu0 %v324, 17
        %v329 = vpop.permute.xlu0 %328
        %330 = vrot.lane.b32.xlu0 %v325, 17
        %v331 = vpop.permute.xlu0 %330
        %v332 = vlaneseq
        %v333 = vand.u32 %v332, 127
        %vm334 = vcmp.lt.s32.totalorder %v333, 17
        %v335 = vsel %vm334, %v329, %v331
        %v336 = vsel %vm334, %v331, %v329
        %v337 = vld [vmem:[#allocation4] ss:$8 sm:$0x3]
        %v339 = vperm.slane %v337, 0
        %v340 = vperm.slane %v337, 1
        %v343 = vmul.f32 %v336, %v339
        %v344 = vmul.f32 %v335, %v340
        %345 = vst [vmem:[#allocation2] sm:$0xf] %v343
        %346 = vst [vmem:[#allocation2 + $0x8] sm:$0xf] %v344
        %347 = vst [vmem:[#allocation1] ss:$2 sm:$0xff] %v321
        %v348 = vld.sshfl [vmem:[#allocation1] sm:$0xff pattern:$0x75316420]
        %v349 = vld.sshfl [vmem:[#allocation1 + $0x8] sm:$0xff pattern:$0x75316420]
        %352 = vrot.lane.b32.xlu0 %v348, 16
        %v353 = vpop.permute.xlu0 %352
        %354 = vrot.lane.b32.xlu0 %v349, 16
        %v355 = vpop.permute.xlu0 %354
        %vm356 = vcmp.lt.s32.totalorder %v333, 16
        %v357 = vsel %vm356, %v353, %v355
        %v358 = vsel %vm356, %v355, %v353
        %s359 = scalar_lea.vmem [#allocation4], 1
        %v360 = vld [vmem:[%s359] ss:$8 sm:$0x3]
        %v362 = vperm.slane %v360, 0
        %v363 = vperm.slane %v360, 1
        %v366 = vmul.f32 %v358, %v362
        %v367 = vmul.f32 %v357, %v363
        %v370 = vrot.slane %v366, 4
        %v371 = vrot.slane %v367, 4
        %374 = vst [vmem:[#allocation2] sm:$0xf0] %v370
        %375 = vst [vmem:[#allocation2 + $0x8] sm:$0xf0] %v371
        %376 = vst [vmem:[#allocation1] ss:$2 sm:$0xff] %v321
        %v377 = vld.sshfl [vmem:[#allocation1] sm:$0xff pattern:$0x75316420]
        %v378 = vld.sshfl [vmem:[#allocation1 + $0x8] sm:$0xff pattern:$0x75316420]
        %381 = vrot.lane.b32.xlu0 %v377, 15
        %v382 = vpop.permute.xlu0 %381
        %383 = vrot.lane.b32.xlu0 %v378, 15
        %v384 = vpop.permute.xlu0 %383
        %vm385 = vcmp.lt.s32.totalorder %v333, 15
        %v386 = vsel %vm385, %v382, %v384
        %v387 = vsel %vm385, %v384, %v382
        %s388 = scalar_lea.vmem [#allocation4], 2
        %v389 = vld [vmem:[%s388] ss:$8 sm:$0x3]
        %v391 = vperm.slane %v389, 0
        %v392 = vperm.slane %v389, 1
        %v395 = vmul.f32 %v387, %v391
        %v396 = vmul.f32 %v386, %v392
        %397 = vst [vmem:[#allocation2 + $0x10] sm:$0xf] %v395
        %398 = vst [vmem:[#allocation2 + $0x18] sm:$0xf] %v396
        %399 = vst [vmem:[#allocation1] ss:$2 sm:$0xff] %v321
        %v400 = vld.sshfl [vmem:[#allocation1] sm:$0xff pattern:$0x75316420]
        %v401 = vld.sshfl [vmem:[#allocation1 + $0x8] sm:$0xff pattern:$0x75316420]
        %404 = vrot.lane.b32.xlu0 %v400, 1
        %v405 = vpop.permute.xlu0 %404
        %406 = vrot.lane.b32.xlu0 %v401, 1
        %v407 = vpop.permute.xlu0 %406
        %vm408 = vcmp.lt.s32.totalorder %v333, 1
        %v409 = vsel %vm408, %v405, %v407
        %v410 = vsel %vm408, %v407, %v405
        %s411 = scalar_lea.vmem [#allocation4], 3
        %v412 = vld [vmem:[%s411] ss:$8 sm:$0x3]
        %v414 = vperm.slane %v412, 0
        %v415 = vperm.slane %v412, 1
        %v418 = vmul.f32 %v410, %v414
        %v419 = vmul.f32 %v409, %v415
        %v422 = vrot.slane %v418, 4
        %v423 = vrot.slane %v419, 4
        %426 = vst [vmem:[#allocation2 + $0x10] sm:$0xf0] %v422
        %427 = vst [vmem:[#allocation2 + $0x18] sm:$0xf0] %v423
        %428 = vst [vmem:[#allocation1] ss:$2 sm:$0xff] %v321
        %v429 = vld.sshfl [vmem:[#allocation1] sm:$0xff pattern:$0x75316420]
        %v430 = vld.sshfl [vmem:[#allocation1 + $0x8] sm:$0xff pattern:$0x75316420]
        %433 = vst [vmem:[#allocation2 + $0x20] sm:$0xf] %v429
        %434 = vst [vmem:[#allocation2 + $0x28] sm:$0xf] %v430
        %435 = vst [vmem:[#allocation1] ss:$2 sm:$0xff] %v321
        %v436 = vld.sshfl [vmem:[#allocation1] sm:$0xff pattern:$0x75316420]
        %v437 = vld.sshfl [vmem:[#allocation1 + $0x8] sm:$0xff pattern:$0x75316420]
        %440 = vrot.lane.b32.xlu0 %v436, 127
        %v441 = vpop.permute.xlu0 %440
        %442 = vrot.lane.b32.xlu0 %v437, 127
        %v443 = vpop.permute.xlu0 %442
        %vm444 = vcmp.lt.s32.totalorder %v333, 127
        %v445 = vsel %vm444, %v441, %v443
        %v446 = vsel %vm444, %v443, %v441
        %s447 = scalar_lea.vmem [#allocation4], 5
        %v448 = vld [vmem:[%s447] ss:$8 sm:$0x3]
        %v450 = vperm.slane %v448, 0
        %v451 = vperm.slane %v448, 1
        %v454 = vmul.f32 %v445, %v450
        %v455 = vmul.f32 %v446, %v451
        %v458 = vrot.slane %v454, 4
        %v459 = vrot.slane %v455, 4
        %462 = vst [vmem:[#allocation2 + $0x20] sm:$0xf0] %v458
        %463 = vst [vmem:[#allocation2 + $0x28] sm:$0xf0] %v459
        %464 = vst [vmem:[#allocation1] ss:$2 sm:$0xff] %v321
        %v465 = vld.sshfl [vmem:[#allocation1] sm:$0xff pattern:$0x75316420]
        %v466 = vld.sshfl [vmem:[#allocation1 + $0x8] sm:$0xff pattern:$0x75316420]
        %469 = vrot.lane.b32.xlu0 %v465, 113
        %v470 = vpop.permute.xlu0 %469
        %471 = vrot.lane.b32.xlu0 %v466, 113
        %v472 = vpop.permute.xlu0 %471
        %vm473 = vcmp.lt.s32.totalorder %v333, 113
        %v474 = vsel %vm473, %v470, %v472
        %v475 = vsel %vm473, %v472, %v470
        %s476 = scalar_lea.vmem [#allocation4], 6
        %v477 = vld [vmem:[%s476] ss:$8 sm:$0x3]
        %v479 = vperm.slane %v477, 0
        %v480 = vperm.slane %v477, 1
        %v483 = vmul.f32 %v474, %v479
        %v484 = vmul.f32 %v475, %v480
        %485 = vst [vmem:[#allocation2 + $0x30] sm:$0xf] %v483
        %486 = vst [vmem:[#allocation2 + $0x38] sm:$0xf] %v484
        %487 = vst [vmem:[#allocation1] ss:$2 sm:$0xff] %v321
        %v488 = vld.sshfl [vmem:[#allocation1] sm:$0xff pattern:$0x75316420]
        %v489 = vld.sshfl [vmem:[#allocation1 + $0x8] sm:$0xff pattern:$0x75316420]
        %492 = vrot.lane.b32.xlu0 %v488, 112
        %v493 = vpop.permute.xlu0 %492
        %494 = vrot.lane.b32.xlu0 %v489, 112
        %v495 = vpop.permute.xlu0 %494
        %vm496 = vcmp.lt.s32.totalorder %v333, 112
        %v497 = vsel %vm496, %v493, %v495
        %v498 = vsel %vm496, %v495, %v493
        %s499 = scalar_lea.vmem [#allocation4], 7
        %v500 = vld [vmem:[%s499] ss:$8 sm:$0x3]
        %v502 = vperm.slane %v500, 0
        %v503 = vperm.slane %v500, 1
        %v506 = vmul.f32 %v497, %v502
        %v507 = vmul.f32 %v498, %v503
        %v510 = vrot.slane %v506, 4
        %v511 = vrot.slane %v507, 4
        %514 = vst [vmem:[#allocation2 + $0x30] sm:$0xf0] %v510
        %515 = vst [vmem:[#allocation2 + $0x38] sm:$0xf0] %v511
        %516 = vst [vmem:[#allocation1] ss:$2 sm:$0xff] %v321
        %v517 = vld.sshfl [vmem:[#allocation1] sm:$0xff pattern:$0x75316420]
        %v518 = vld.sshfl [vmem:[#allocation1 + $0x8] sm:$0xff pattern:$0x75316420]
        %521 = vrot.lane.b32.xlu0 %v517, 111
        %v522 = vpop.permute.xlu0 %521
        %523 = vrot.lane.b32.xlu0 %v518, 111
        %v524 = vpop.permute.xlu0 %523
        %vm525 = vcmp.lt.s32.totalorder %v333, 111
        %v526 = vsel %vm525, %v522, %v524
        %v527 = vsel %vm525, %v524, %v522
        %s528 = scalar_lea.vmem [#allocation4], 16
        %v529 = vld [vmem:[%s528] ss:$8 sm:$0x3]
        %v531 = vperm.slane %v529, 0
        %v532 = vperm.slane %v529, 1
        %v535 = vmul.f32 %v526, %v531
        %v536 = vmul.f32 %v527, %v532
        %537 = vst [vmem:[#allocation2 + $0x40] sm:$0xf] %v535
        %538 = vst [vmem:[#allocation2 + $0x48] sm:$0xf] %v536
        %v539 = vld [vmem:[%s2] sm:$0xff]
        %v540 = vld [vmem:[#allocation2] sm:$0xff]
        %v541 = vld [vmem:[#allocation2 + $0x8] sm:$0xff]
        %v542 = vld [vmem:[#allocation2 + $0x10] sm:$0xff]
        %v543 = vld [vmem:[#allocation2 + $0x18] sm:$0xff]
        %v544 = vld [vmem:[#allocation2 + $0x20] sm:$0xff]
        %v545 = vld [vmem:[#allocation2 + $0x28] sm:$0xff]
        %v546 = vld [vmem:[#allocation2 + $0x30] sm:$0xff]
        %v547 = vld [vmem:[#allocation2 + $0x38] sm:$0xff]
        %v548 = vld [vmem:[#allocation2 + $0x40] sm:$0xf]
        %v549 = vld [vmem:[#allocation2 + $0x48] sm:$0xf]
        %vm550 = vcmask 293888
        %v552 = vsel %vm550, %v539, 0
        %vm554 = vcmask 1043456
        %v556 = vsel %vm554, %v548, 0
        %v559 = vsel %vm554, %v549, 0
        %561 = vmatpush.msra.mxu0 0.0
        %562 = vmatpush.msra.mxu0 0.0
        %563 = vmatpush.msra.mxu0 0.0
        %564 = vmatpush.msra.mxu0 0.0
        %565 = vmatpush.msra.mxu0 0.0
        %566 = vmatpush.msra.mxu0 0.0
        %567 = vmatpush.msra.mxu0 0.0
        %568 = vmatpush.msra.mxu0 0.0
        %569 = vmatpush.msra.mxu0 0.0
        %570 = vmatpush.msra.mxu0 0.0
        %571 = vmatpush.msra.mxu0 0.0
        %572 = vmatpush.msra.mxu0 %v556
        %573 = vmatpush.msra.mxu0 %v546
        %574 = vmatpush.msra.mxu0 %v544
        %575 = vmatpush.msra.mxu0 %v542
        %576 = vmatpush.msra.mxu0 %v540
        %577 = vmatmul.f32.gmra.mxu0 %v552
        %v578 = vpop.f32.mrf.mxu0
        %v579 = vadd.f32 0.0, %v578
        %580 = vdwg.mxu0
        %581 = vmatpush.msra.mxu0 0.0
        %582 = vmatpush.msra.mxu0 0.0
        %583 = vmatpush.msra.mxu0 0.0
        %584 = vmatpush.msra.mxu0 0.0
        %585 = vmatpush.msra.mxu0 0.0
        %586 = vmatpush.msra.mxu0 0.0
        %587 = vmatpush.msra.mxu0 0.0
        %588 = vmatpush.msra.mxu0 0.0
        %589 = vmatpush.msra.mxu0 0.0
        %590 = vmatpush.msra.mxu0 0.0
        %591 = vmatpush.msra.mxu0 0.0
        %592 = vmatpush.msra.mxu0 %v559
        %593 = vmatpush.msra.mxu0 %v547
        %594 = vmatpush.msra.mxu0 %v545
        %595 = vmatpush.msra.mxu0 %v543
        %596 = vmatpush.msra.mxu0 %v541
        %597 = vmatmul.f32.gmra.mxu0 %v552
        %v598 = vpop.f32.mrf.mxu0
        %v599 = vadd.f32 0.0, %v598
        %600 = vdwg.mxu0
        %v601 = vadd.f32 %v579, %v599
        %602 = vadd.xlane.f32.xlu0 %v601
        %v603 = vpop.xlane.xlu0 %602
        %v604 = vrot.slane %v603, 4
        %v605 = vadd.f32 %v603, %v604
        %v606 = vrot.slane %v605, 2
        %v607 = vadd.f32 %v605, %v606
        %v608 = vrot.slane %v607, 1
        %v609 = vadd.f32 %v607, %v608
        %s610 = vtos %v609
        %s611 = smul.f32 %s610, 0.00048828125
        %v612 = vmul.f32 %v579, %v579
        %v613 = vmul.f32 %v599, %v599
        %v614 = vadd.f32 %v612, %v613
        %615 = vadd.xlane.f32.xlu0 %v614
        %v616 = vpop.xlane.xlu0 %615
        %v617 = vrot.slane %v616, 4
        %v618 = vadd.f32 %v616, %v617
        %v619 = vrot.slane %v618, 2
        %v620 = vadd.f32 %v618, %v619
        %v621 = vrot.slane %v620, 1
        %v622 = vadd.f32 %v620, %v621
        %s623 = vtos %v622
        %s624 = smul.f32 %s623, 0.00048828125
        %s625 = smul.f32 %s611, %s611
        %s626 = ssub.f32 %s624, %s625
        %v627 = vstv %s611
        %v628 = vsub.f32 %v579, %v627
        %v629 = vsub.f32 %v599, %v627
        %s630 = sadd.f32 %s626, 1e-05
        %v631 = vstv %s630
        %v632 = vrsqrt.pop %v631
        %v633 = vmul.f32 %v632, %v631
        %v634 = vmul.f32 %v633, %v632
        %v635 = vmul.f32 0.5, %v634
        %v636 = vsub.f32 1.5, %v635
        %v637 = vmul.f32 %v632, %v636
        %vm638 = vweird.f32 %v631
        %vm639 = vweird.f32 %v632
        %vm640 = vmor %vm638, %vm639
        %v641 = vsel %vm640, %v632, %v637
        %s642 = vtos %v641
        %v643 = vstv %s642
        %v644 = vmul.f32 %v628, %v643
        %v645 = vmul.f32 %v629, %v643
        %v646 = vld [vmem:[%s3] sm:$0xff]
        %648 = vset.pattern.permute.xlu0 0
        %649 = vperm.xlu0 %648, %v646
        %v650 = vpop.permute.xlu0 %649
        %v652 = vmul.f32 %v644, %v650
        %v653 = vmul.f32 %v645, %v650
        %v654 = vld [vmem:[%s4] sm:$0xff]
        %656 = vset.pattern.permute.xlu0 0
        %657 = vperm.xlu0 %656, %v654
        %v658 = vpop.permute.xlu0 %657
        %v660 = vadd.f32 %v652, %v658
        %v661 = vadd.f32 %v653, %v658
        %v662 = vmul.f32 %v660, 0.5
        %v663 = vmul.f32 %v661, 0.5
        %v664 = vmul.f32 %v660, 0.70710677
        %v665 = vmul.f32 %v661, 0.70710677
        %v666 = vmul.f32 %v664, %v664
        %v667 = vmin.f32 16.0, %v666
        %v668 = vmul.f32 %v667, 2.1237322e-06
        %v669 = vadd.f32 %v668, 0.00028619796
        %v670 = vmul.f32 %v667, %v669
        %v671 = vadd.f32 %v670, 0.0036580483
        %v672 = vmul.f32 %v667, %v671
        %v673 = vadd.f32 %v672, 0.05243302
        %v674 = vmul.f32 %v667, %v673
        %v675 = vadd.f32 %v674, 0.18741608
        %v676 = vmul.f32 %v667, %v675
        %v677 = vadd.f32 %v676, 1.1283791
        %v678 = vmul.f32 %v664, %v677
        %v679 = vmul.f32 %v667, 3.8918573e-05
        %v680 = vadd.f32 %v679, 0.001143296
        %v681 = vmul.f32 %v667, %v680
        %v682 = vadd.f32 %v681, 0.014752088
        %v683 = vmul.f32 %v667, %v682
        %v684 = vadd.f32 %v683, 0.112945676
        %v685 = vmul.f32 %v667, %v684
        %v686 = vadd.f32 %v685, 0.4994258
        %v687 = vmul.f32 %v667, %v686
        %v688 = vadd.f32 %v687, 1.0
        %v689 = vrcp.pop %v688
        %v690 = vmul.f32 %v688, %v689
        %v691 = vsub.f32 1.0, %v690
        %v692 = vmul.f32 %v689, %v691
        %v693 = vadd.f32 %v689, %v692
        %vm694 = vweird.f32 %v688
        %vm695 = vweird.f32 %v689
        %vm696 = vmor %vm694, %vm695
        %v697 = vsel %vm696, %v689, %v693
        %v698 = vand.u32 2147483647, %v688
        %vm699 = vcmp.eq.f32.partialorder %v698, 8.507059e+37
        %v700 = vand.u32 %v688, 2147483648
        %v701 = vor.u32 1.1754944e-38, %v700
        %v702 = vsel %vm699, %v701, %v697
        %v703 = vmul.f32 %v678, %v702
        %v704 = vmin.f32 %v703, 1.0
        %v705 = vmax.f32 %v704, -1.0
        %v706 = vmul.f32 %v665, %v665
        %v707 = vmin.f32 16.0, %v706
        %v708 = vmul.f32 %v707, 2.1237322e-06
        %v709 = vadd.f32 %v708, 0.00028619796
        %v710 = vmul.f32 %v707, %v709
        %v711 = vadd.f32 %v710, 0.0036580483
        %v712 = vmul.f32 %v707, %v711
        %v713 = vadd.f32 %v712, 0.05243302
        %v714 = vmul.f32 %v707, %v713
        %v715 = vadd.f32 %v714, 0.18741608
        %v716 = vmul.f32 %v707, %v715
        %v717 = vadd.f32 %v716, 1.1283791
        %v718 = vmul.f32 %v665, %v717
        %v719 = vmul.f32 %v707, 3.8918573e-05
        %v720 = vadd.f32 %v719, 0.001143296
        %v721 = vmul.f32 %v707, %v720
        %v722 = vadd.f32 %v721, 0.014752088
        %v723 = vmul.f32 %v707, %v722
        %v724 = vadd.f32 %v723, 0.112945676
        %v725 = vmul.f32 %v707, %v724
        %v726 = vadd.f32 %v725, 0.4994258
        %v727 = vmul.f32 %v707, %v726
        %v728 = vadd.f32 %v727, 1.0
        %v729 = vrcp.pop %v728
        %v730 = vmul.f32 %v728, %v729
        %v731 = vsub.f32 1.0, %v730
        %v732 = vmul.f32 %v729, %v731
        %v733 = vadd.f32 %v729, %v732
        %vm734 = vweird.f32 %v728
        %vm735 = vweird.f32 %v729
        %vm736 = vmor %vm734, %vm735
        %v737 = vsel %vm736, %v729, %v733
        %v738 = vand.u32 2147483647, %v728
        %vm739 = vcmp.eq.f32.partialorder %v738, 8.507059e+37
        %v740 = vand.u32 %v728, 2147483648
        %v741 = vor.u32 1.1754944e-38, %v740
        %v742 = vsel %vm739, %v741, %v737
        %v743 = vmul.f32 %v718, %v742
        %v744 = vmin.f32 %v743, 1.0
        %v745 = vmax.f32 %v744, -1.0
        %v746 = vadd.f32 %v705, 1.0
        %v747 = vadd.f32 %v745, 1.0
        %v748 = vmul.f32 %v662, %v746
        %v749 = vmul.f32 %v663, %v747
        %750 = vrot.lane.b32.xlu0 %v748, 17
        %v751 = vpop.permute.xlu0 %750
        %752 = vrot.lane.b32.xlu0 %v749, 17
        %v753 = vpop.permute.xlu0 %752
        %v754 = vsel %vm334, %v751, %v753
        %v755 = vsel %vm334, %v753, %v751
        %v756 = vld [vmem:[#allocation4] ss:$8 sm:$0x3]
        %v758 = vperm.slane %v756, 0
        %v759 = vperm.slane %v756, 1
        %v762 = vmul.f32 %v755, %v758
        %v763 = vmul.f32 %v754, %v759
        %764 = vst [vmem:[#allocation3] sm:$0xff] %v762
        %765 = vst [vmem:[#allocation3 + $0x8] sm:$0xff] %v763
        %766 = vrot.lane.b32.xlu0 %v748, 16
        %v767 = vpop.permute.xlu0 %766
        %768 = vrot.lane.b32.xlu0 %v749, 16
        %v769 = vpop.permute.xlu0 %768
        %v770 = vsel %vm356, %v767, %v769
        %v771 = vsel %vm356, %v769, %v767
        %v772 = vld [vmem:[%s359] ss:$8 sm:$0x3]
        %v774 = vperm.slane %v772, 0
        %v775 = vperm.slane %v772, 1
        %v778 = vmul.f32 %v771, %v774
        %v779 = vmul.f32 %v770, %v775
        %780 = vst [vmem:[#allocation3 + $0x10] sm:$0xff] %v778
        %781 = vst [vmem:[#allocation3 + $0x18] sm:$0xff] %v779
        %782 = vrot.lane.b32.xlu0 %v748, 15
        %v783 = vpop.permute.xlu0 %782
        %784 = vrot.lane.b32.xlu0 %v749, 15
        %v785 = vpop.permute.xlu0 %784
        %v786 = vsel %vm385, %v783, %v785
        %v787 = vsel %vm385, %v785, %v783
        %v788 = vld [vmem:[%s388] ss:$8 sm:$0x3]
        %v790 = vperm.slane %v788, 0
        %v791 = vperm.slane %v788, 1
        %v794 = vmul.f32 %v787, %v790
        %v795 = vmul.f32 %v786, %v791
        %796 = vst [vmem:[#allocation3 + $0x20] sm:$0xff] %v794
        %797 = vst [vmem:[#allocation3 + $0x28] sm:$0xff] %v795
        %798 = vrot.lane.b32.xlu0 %v748, 1
        %v799 = vpop.permute.xlu0 %798
        %800 = vrot.lane.b32.xlu0 %v749, 1
        %v801 = vpop.permute.xlu0 %800
        %v802 = vsel %vm408, %v799, %v801
        %v803 = vsel %vm408, %v801, %v799
        %v804 = vld [vmem:[%s411] ss:$8 sm:$0x3]
        %v806 = vperm.slane %v804, 0
        %v807 = vperm.slane %v804, 1
        %v810 = vmul.f32 %v803, %v806
        %v811 = vmul.f32 %v802, %v807
        %812 = vst [vmem:[#allocation3 + $0x30] sm:$0xff] %v810
        %813 = vst [vmem:[#allocation3 + $0x38] sm:$0xff] %v811
        %814 = vst [vmem:[#allocation3 + $0x40] sm:$0xff] %v748
        %815 = vst [vmem:[#allocation3 + $0x48] sm:$0xff] %v749
        %816 = vrot.lane.b32.xlu0 %v748, 127
        %v817 = vpop.permute.xlu0 %816
        %818 = vrot.lane.b32.xlu0 %v749, 127
        %v819 = vpop.permute.xlu0 %818
        %v820 = vsel %vm444, %v817, %v819
        %v821 = vsel %vm444, %v819, %v817
        %v822 = vld [vmem:[%s447] ss:$8 sm:$0x3]
        %v824 = vperm.slane %v822, 0
        %v825 = vperm.slane %v822, 1
        %v828 = vmul.f32 %v820, %v824
        %v829 = vmul.f32 %v821, %v825
        %830 = vst [vmem:[#allocation3 + $0x50] sm:$0xff] %v828
        %831 = vst [vmem:[#allocation3 + $0x58] sm:$0xff] %v829
        %832 = vrot.lane.b32.xlu0 %v748, 113
        %v833 = vpop.permute.xlu0 %832
        %834 = vrot.lane.b32.xlu0 %v749, 113
        %v835 = vpop.permute.xlu0 %834
        %v836 = vsel %vm473, %v833, %v835
        %v837 = vsel %vm473, %v835, %v833
        %v838 = vld [vmem:[%s476] ss:$8 sm:$0x3]
        %v840 = vperm.slane %v838, 0
        %v841 = vperm.slane %v838, 1
        %v844 = vmul.f32 %v836, %v840
        %v845 = vmul.f32 %v837, %v841
        %846 = vst [vmem:[#allocation3 + $0x60] sm:$0xff] %v844
        %847 = vst [vmem:[#allocation3 + $0x68] sm:$0xff] %v845
        %848 = vrot.lane.b32.xlu0 %v748, 112
        %v849 = vpop.permute.xlu0 %848
        %850 = vrot.lane.b32.xlu0 %v749, 112
        %v851 = vpop.permute.xlu0 %850
        %v852 = vsel %vm496, %v849, %v851
        %v853 = vsel %vm496, %v851, %v849
        %v854 = vld [vmem:[%s499] ss:$8 sm:$0x3]
        %v856 = vperm.slane %v854, 0
        %v857 = vperm.slane %v854, 1
        %v860 = vmul.f32 %v852, %v856
        %v861 = vmul.f32 %v853, %v857
        %862 = vst [vmem:[#allocation3 + $0x70] sm:$0xff] %v860
        %863 = vst [vmem:[#allocation3 + $0x78] sm:$0xff] %v861
        %864 = vrot.lane.b32.xlu0 %v748, 111
        %v865 = vpop.permute.xlu0 %864
        %866 = vrot.lane.b32.xlu0 %v749, 111
        %v867 = vpop.permute.xlu0 %866
        %v868 = vsel %vm525, %v865, %v867
        %v869 = vsel %vm525, %v867, %v865
        %v870 = vld [vmem:[%s528] ss:$8 sm:$0x3]
        %v872 = vperm.slane %v870, 0
        %v873 = vperm.slane %v870, 1
        %v876 = vmul.f32 %v868, %v872
        %v877 = vmul.f32 %v869, %v873
        %878 = vst [vmem:[#allocation3 + $0x80] sm:$0xff] %v876
        %879 = vst [vmem:[#allocation3 + $0x88] sm:$0xff] %v877
        %v880 = vld [vmem:[%s5] sm:$0xff]
        %v881 = vld [vmem:[#allocation3] sm:$0xff]
        %v882 = vld [vmem:[#allocation3 + $0x8] sm:$0xff]
        %v883 = vld [vmem:[#allocation3 + $0x10] sm:$0xff]
        %v884 = vld [vmem:[#allocation3 + $0x18] sm:$0xff]
        %v885 = vld [vmem:[#allocation3 + $0x20] sm:$0xff]
        %v886 = vld [vmem:[#allocation3 + $0x28] sm:$0xff]
        %v887 = vld [vmem:[#allocation3 + $0x30] sm:$0xff]
        %v888 = vld [vmem:[#allocation3 + $0x38] sm:$0xff]
        %v889 = vld [vmem:[#allocation3 + $0x40] sm:$0xff]
        %v890 = vld [vmem:[#allocation3 + $0x48] sm:$0xff]
        %v891 = vld [vmem:[#allocation3 + $0x50] sm:$0xff]
        %v892 = vld [vmem:[#allocation3 + $0x58] sm:$0xff]
        %v893 = vld [vmem:[#allocation3 + $0x60] sm:$0xff]
        %v894 = vld [vmem:[#allocation3 + $0x68] sm:$0xff]
        %v895 = vld [vmem:[#allocation3 + $0x70] sm:$0xff]
        %v896 = vld [vmem:[#allocation3 + $0x78] sm:$0xff]
        %v897 = vld [vmem:[#allocation3 + $0x80] sm:$0xff]
        %v898 = vld [vmem:[#allocation3 + $0x88] sm:$0xff]
        %vm899 = vcmask 588800
        %v901 = vsel %vm899, %v880, 0
        %903 = vmatpush.msra.mxu0 0.0
        %904 = vmatpush.msra.mxu0 0.0
        %905 = vmatpush.msra.mxu0 0.0
        %906 = vmatpush.msra.mxu0 0.0
        %907 = vmatpush.msra.mxu0 0.0
        %908 = vmatpush.msra.mxu0 0.0
        %909 = vmatpush.msra.mxu0 0.0
        %910 = vmatpush.msra.mxu0 %v897
        %911 = vmatpush.msra.mxu0 %v895
        %912 = vmatpush.msra.mxu0 %v893
        %913 = vmatpush.msra.mxu0 %v891
        %914 = vmatpush.msra.mxu0 %v889
        %915 = vmatpush.msra.mxu0 %v887
        %916 = vmatpush.msra.mxu0 %v885
        %917 = vmatpush.msra.mxu0 %v883
        %918 = vmatpush.msra.mxu0 %v881
        %919 = vmatmul.f32.gmra.mxu0 %v901
        %v920 = vpop.f32.mrf.mxu0
        %v921 = vadd.f32 0.0, %v920
        %922 = vdwg.mxu0
        %923 = vmatpush.msra.mxu0 0.0
        %924 = vmatpush.msra.mxu0 0.0
        %925 = vmatpush.msra.mxu0 0.0
        %926 = vmatpush.msra.mxu0 0.0
        %927 = vmatpush.msra.mxu0 0.0
        %928 = vmatpush.msra.mxu0 0.0
        %929 = vmatpush.msra.mxu0 0.0
        %930 = vmatpush.msra.mxu0 %v898
        %931 = vmatpush.msra.mxu0 %v896
        %932 = vmatpush.msra.mxu0 %v894
        %933 = vmatpush.msra.mxu0 %v892
        %934 = vmatpush.msra.mxu0 %v890
        %935 = vmatpush.msra.mxu0 %v888
        %936 = vmatpush.msra.mxu0 %v886
        %937 = vmatpush.msra.mxu0 %v884
        %938 = vmatpush.msra.mxu0 %v882
        %939 = vmatmul.f32.gmra.mxu0 %v901
        %v940 = vpop.f32.mrf.mxu0
        %v941 = vadd.f32 0.0, %v940
        %942 = vdwg.mxu0
        %v943 = vadd.f32 %v921, %v941
        %944 = vadd.xlane.f32.xlu0 %v943
        %v945 = vpop.xlane.xlu0 %944
        %v946 = vrot.slane %v945, 4
        %v947 = vadd.f32 %v945, %v946
        %v948 = vrot.slane %v947, 2
        %v949 = vadd.f32 %v947, %v948
        %v950 = vrot.slane %v949, 1
        %v951 = vadd.f32 %v949, %v950
        %s952 = vtos %v951
        %s953 = smul.f32 %s952, 0.00048828125
        %v954 = vmul.f32 %v921, %v921
        %v955 = vmul.f32 %v941, %v941
        %v956 = vadd.f32 %v954, %v955
        %957 = vadd.xlane.f32.xlu0 %v956
        %v958 = vpop.xlane.xlu0 %957
        %v959 = vrot.slane %v958, 4
        %v960 = vadd.f32 %v958, %v959
        %v961 = vrot.slane %v960, 2
        %v962 = vadd.f32 %v960, %v961
        %v963 = vrot.slane %v962, 1
        %v964 = vadd.f32 %v962, %v963
        %s965 = vtos %v964
        %s966 = smul.f32 %s965, 0.00048828125
        %s967 = smul.f32 %s953, %s953
        %s968 = ssub.f32 %s966, %s967
        %v969 = vstv %s953
        %v970 = vsub.f32 %v921, %v969
        %v971 = vsub.f32 %v941, %v969
        %s972 = sadd.f32 %s968, 1e-05
        %v973 = vstv %s972
        %v974 = vrsqrt.pop %v973
        %v975 = vmul.f32 %v974, %v973
        %v976 = vmul.f32 %v975, %v974
        %v977 = vmul.f32 0.5, %v976
        %v978 = vsub.f32 1.5, %v977
        %v979 = vmul.f32 %v974, %v978
        %vm980 = vweird.f32 %v973
        %vm981 = vweird.f32 %v974
        %vm982 = vmor %vm980, %vm981
        %v983 = vsel %vm982, %v974, %v979
        %s984 = vtos %v983
        %v985 = vstv %s984
        %v986 = vmul.f32 %v970, %v985
        %v987 = vmul.f32 %v971, %v985
        %v988 = vld [vmem:[%s6] sm:$0xff]
        %990 = vset.pattern.permute.xlu0 0
        %991 = vperm.xlu0 %990, %v988
        %v992 = vpop.permute.xlu0 %991
        %v994 = vmul.f32 %v986, %v992
        %v995 = vmul.f32 %v987, %v992
        %v996 = vld [vmem:[%s7] sm:$0xff]
        %998 = vset.pattern.permute.xlu0 0
        %999 = vperm.xlu0 %998, %v996
        %v1000 = vpop.permute.xlu0 %999
        %v1002 = vadd.f32 %v994, %v1000
        %v1003 = vadd.f32 %v995, %v1000
        %1004 = vst [vmem:[%s315] sm:$0xff] %v1002
        %1005 = vst [vmem:[%s315 + $0x8] sm:$0xff] %v1003
        %s1006 = sand.u32 %s204, 1
        %s1007 = scalar_lea.sflag [#allocation6], %s1006
        %s1008 = sand.u32 %s204, 1
        %s1009 = smul.addr %s1008, 16
        %s1010 = scalar_lea.vmem [#allocation7], %s1009
        // Predicated region
        $region57: #{tpu_custom_call.1} parent=51 // pred_check
          %p1011 = pneg %p214
        $region58: #{tpu_custom_call.1} parent=51 // pred_check_branch
          %1013 = sbr.rel (%p1011) target = $region60
        $region59: #{tpu_custom_call.1} parent=51 // pred_region
          %1015 = vsyncadd %s1007, 0
          %s1016 = smul.addr %s23, 2
          %s1017 = smul.addr %s1016, 8
          %s1018 = scalar_lea.hbm %s8, %s1017
          %s1020 = sshll.u32 %s1010, 4
          %s1021 = int_to_ptr.vmem [resolvable:$true] %s1020
          %s1022 = sshll.u32 %s1018, 4
          %s1023 = int_to_ptr.hbm [resolvable:$true] %s1022
          %1025 = dma.vmem_to_hbm [thread:$0]  %s1021, 256, %s1023, %s1007
        $region60: #{tpu_custom_call.1} parent=51 // pred_fallthru
          _
      $region52: #{tpu_custom_call.1} parent=5 // pred_fallthru
        _
      %p1026 = scmp.le.s32.totalorder 2, %s18
      // Predicated region
      $region61: #{tpu_custom_call.1} parent=5 // pred_check
        %p1027 = pneg %p1026
      $region62: #{tpu_custom_call.1} parent=5 // pred_check_branch
        %1029 = sbr.rel (%p1027) target = $region64
      $region63: #{tpu_custom_call.1} parent=5 // pred_region
        %s1030 = ssub.s32 %s18, 2
        // Predicated region
        $region65: #{tpu_custom_call.1} parent=63 // pred_check
          %p1031 = pneg %p220
        $region66: #{tpu_custom_call.1} parent=63 // pred_check_branch
          %1033 = sbr.rel (%p1031) target = $region68
        $region67: #{tpu_custom_call.1} parent=63 // pred_region
          %s1034 = sand.u32 %s205, 1
          %s1035 = scalar_lea.sflag [#allocation6], %s1034
          %s1036 = sand.u32 %s205, 1
          %s1037 = smul.addr %s1036, 16
          %s1038 = scalar_lea.vmem [#allocation7], %s1037
          %1040 = dma.done %s1035, 256
        $region68: #{tpu_custom_call.1} parent=63 // pred_fallthru
          _
      $region64: #{tpu_custom_call.1} parent=5 // pred_fallthru
        _
    $region6: #{tpu_custom_call.1} parent=1 // loop_footer
      %s22 = sadd.s32 1, %s18
    $region7: #{tpu_custom_call.1} parent=1 // loop_footer_branch
      %17 = sbr.rel target = $region3
    $region8: #{tpu_custom_call.1} parent=1 // loop_exit
      _
    %1041 = vsyncpa [#allocation5], 1
    %s1042 = scalar_lea.sflag [#allocation5], 1
    %1043 = vsyncpa %s1042, 1
    %1044 = vsyncpa [#allocation6], 1
    %s1045 = scalar_lea.sflag [#allocation6], 1
    %1046 = vsyncpa %s1045, 1

</llo_original>
